<compile_context>
chip_gen: v7x
topology: tpu7x:2x2x1
jax: 0.10.0
libtpu: 0.0.40
codegen_flags: <defaults>
</compile_context>

<pallas_src>
import functools
import math

import jax
import jax.numpy as jnp
from jax.experimental import pallas as pl
from jax.experimental.pallas import tpu as pltpu

ORDERS = 2                      # diffusion orders per support
NUM_MATRICES = 2 * ORDERS + 1   # K = x0 + orders terms per support (2 supports)


# ---------------------------------------------------------------------------
# Compiler params: generation-aware VMEM limit + parallel batch-tile grid.
# ---------------------------------------------------------------------------
def _vmem_capacity_bytes():
    try:
        cap = getattr(pltpu.get_tpu_info(), "vmem_capacity_bytes", None)
        if cap:
            return int(cap)
    except Exception:
        pass
    return 64 << 20  # conservative fallback = v7x per-core VMEM


def _mosaic_params(vmem_hint_bytes):
    cap = _vmem_capacity_bytes()
    # Keep ~15% headroom for compiler-internal scratch / semaphores:
    # ≈54 MiB on v7x (64 MiB phys), ≈108 MiB on v5e/v6e (128 MiB phys).
    limit = int(min(max(vmem_hint_bytes + (8 << 20), 32 << 20), (cap * 85) // 100))
    return pltpu.CompilerParams(
        dimension_semantics=("parallel",), vmem_limit_bytes=limit)


# ---------------------------------------------------------------------------
# One-time parameter preparation (hoisted out of the per-forward path).
# ---------------------------------------------------------------------------
def _split_theta(theta1_flat, c_in, c_out, k):
    # Theta1 rows are indexed (c_in, k) with k minor -- matches the PyTorch
    # reshape([K, N, C_in, B]).permute(3,1,2,0).reshape(B, N, C_in*K) flattening.
    return jnp.transpose(
        jnp.reshape(theta1_flat.astype(jnp.float32), (c_in, k, c_out)), (1, 0, 2))


def _block_diag_per_term(theta_k, bt):
    # theta_k: (K, c_in, c_out) -> (K, bt*c_in, bt*c_out) block-diagonal per term,
    # so a single (N, bt*c_in) @ (bt*c_in, bt*c_out) dot projects every batch.
    k, c_in, c_out = theta_k.shape
    eye = jnp.eye(bt, dtype=jnp.float32)
    blk = jnp.einsum("ij,kab->kiajb", eye, theta_k)
    return jnp.reshape(blk, (k, bt * c_in, bt * c_out))


def _block_diag(w, bt):
    c_in, c_out = w.shape
    eye = jnp.eye(bt, dtype=jnp.float32)
    return jnp.reshape(jnp.einsum("ij,ab->iajb", eye, w.astype(jnp.float32)),
                       (bt * c_in, bt * c_out))


def _tile_bias(b, bt):
    return jnp.reshape(jnp.tile(b.astype(jnp.float32), (bt,)), (1, -1))


def prepare_params(params, *, num_timesteps, batch_tile, orders=ORDERS):
    """One-time preprocessing of ST_Gau weights into the fused-kernel layout."""
    k = 2 * orders + 1
    t = num_timesteps
    bt = batch_tile
    c1 = params["sc1_theta"].shape[1]
    c2 = params["sc2_theta"].shape[1]
    c3 = params["sc3_theta"].shape[1]
    assert params["sc1_theta"].shape[0] == t * k
    assert params["sc2_theta"].shape[0] == c1 * k
    assert params["sc3_theta"].shape[0] == c2 * k

    th1 = _block_diag_per_term(_split_theta(params["sc1_theta"], t, c1, k), bt)
    th2 = _block_diag_per_term(_split_theta(params["sc2_theta"], c1, c2, k), bt)
    th3 = _block_diag_per_term(_split_theta(params["sc3_theta"], c2, c3, k), bt)

    # Concatenated Gaussian head: per-batch output lanes are [loc (T) | scale (T)].
    w_head = jnp.concatenate([params["loc_w"], params["scale_w"]], axis=1)   # (c3, 2T)
    b_head = jnp.concatenate([params["loc_b"], params["scale_b"]], axis=0)   # (2T,)

    return dict(
        batch_tile=bt, orders=orders, dims=(t, c1, c2, c3),
        th1=th1, b1=_tile_bias(params["sc1_bias"], bt),
        th2=th2, b2=_tile_bias(params["sc2_bias"], bt),
        th3=th3, b3=_tile_bias(params["sc3_bias"], bt),
        wh=_block_diag(w_head, bt), bh=_tile_bias(b_head, bt),
    )


# ---------------------------------------------------------------------------
# Fused kernel: 3x (diffusion + projection + bias + ReLU) + Gaussian head.
# ---------------------------------------------------------------------------
def _st_gau_kernel(x_ref, aq_ref, ah_ref,
                   th1_ref, b1_ref, th2_ref, b2_ref, th3_ref, b3_ref,
                   wh_ref, bh_ref, o_ref, *, orders, t_out):
    A_q = aq_ref[...]
    A_h = ah_ref[...]

    def d_gcn_layer(h, th_ref, b_ref):
        # h: (N, Bt*C_in); th_ref[k]: block-diagonal (Bt*C_in, Bt*C_out).
        # Faithful PyTorch recurrence x2 = 2*A@x1 - x0 with (x1,x0)<-(x2,x1),
        # and the mutated x0 carried across the two supports.  Each diffusion
        # term is projected and accumulated immediately (no stacking).
        acc = jnp.dot(h, th_ref[0], preferred_element_type=jnp.float32)
        idx = 1
        cur_x0 = h
        for A in (A_q, A_h):
            x1 = jnp.dot(A, cur_x0, preferred_element_type=jnp.float32)
            acc = acc + jnp.dot(x1, th_ref[idx], preferred_element_type=jnp.float32)
            idx += 1
            for _ in range(2, orders + 1):
                x2 = 2.0 * jnp.dot(A, x1, preferred_element_type=jnp.float32) - cur_x0
                acc = acc + jnp.dot(x2, th_ref[idx], preferred_element_type=jnp.float32)
                idx += 1
                x1, cur_x0 = x2, x1
        return jnp.maximum(acc + b_ref[...], 0.0)

    h = d_gcn_layer(x_ref[...], th1_ref, b1_ref)       # SC1
    h = d_gcn_layer(h, th2_ref, b2_ref)                 # SC2
    h = d_gcn_layer(h, th3_ref, b3_ref)                 # SC3

    out = jnp.dot(h, wh_ref[...], preferred_element_type=jnp.float32) + bh_ref[...]
    # Per-batch lane layout is [loc (t_out) | scale (t_out)]; softplus only the
    # scale lanes.  Stable softplus: max(s,0) + log1p(exp(-|s|)).
    lane = jax.lax.broadcasted_iota(jnp.int32, out.shape, 1)
    is_scale = (lane % (2 * t_out)) >= t_out
    sp = jnp.maximum(out, 0.0) + jnp.log1p(jnp.exp(-jnp.abs(out)))
    o_ref[...] = jnp.where(is_scale, sp, out).astype(o_ref.dtype)


# ---------------------------------------------------------------------------
# ST_Gau forward (spatial branch: SC1 -> SC2 -> SC3 -> SGau) -- one pallas_call.
# ---------------------------------------------------------------------------
def st_gau_forward(X, A_q, A_h, prep):
    B, N, T = X.shape
    bt = prep["batch_tile"]
    orders = prep["orders"]
    t, c1, c2, c3 = prep["dims"]
    assert t == T and B % bt == 0, (X.shape, bt, prep["dims"])
    grid_b = B // bt
    two_t = 2 * T

    # Batch-major / channel-minor lane layout: Xp[n, b*T + tau] = X[b, n, tau].
    Xp = jnp.reshape(jnp.transpose(X.astype(jnp.float32), (1, 0, 2)), (N, B * T))
    A_qf = A_q.astype(jnp.float32)
    A_hf = A_h.astype(jnp.float32)

    resident = (A_qf, A_hf, prep["th1"], prep["b1"], prep["th2"], prep["b2"],
                prep["th3"], prep["b3"], prep["wh"], prep["bh"])
    resident_bytes = 4 * sum(int(r.size) for r in resident)
    stream_bytes = 4 * (N * bt * T + N * bt * two_t)
    c_max = max(T, c1, c2, c3, two_t)
    # Resident + double-buffered streamed blocks + diffusion temporaries.
    vmem_hint = 2 * (resident_bytes + stream_bytes) + 4 * 8 * N * bt * c_max

    def _layer_flops(cin, cout):
        return ((2 * orders) * 2 * N * N * (bt * cin)
                + (2 * orders + 1) * 2 * N * (bt * cin) * (bt * cout))

    flops = grid_b * (_layer_flops(T, c1) + _layer_flops(c1, c2)
                      + _layer_flops(c2, c3) + 2 * N * (bt * c3) * (bt * two_t))
    bytes_accessed = 4 * (B * N * T + B * N * two_t) + resident_bytes

    kernel = functools.partial(_st_gau_kernel, orders=orders, t_out=T)

    out = pl.pallas_call(
        kernel,
        out_shape=jax.ShapeDtypeStruct((N, B * two_t), jnp.float32),
        grid=(grid_b,),
        in_specs=[
            pl.BlockSpec((N, bt * T), lambda g: (0, g)),            # X tile (streamed)
            pl.BlockSpec((N, N), lambda g: (0, 0)),                 # A_q (resident)
            pl.BlockSpec((N, N), lambda g: (0, 0)),                 # A_h (resident)
            pl.BlockSpec(prep["th1"].shape, lambda g: (0, 0, 0)),   # SC1 Theta (resident)
            pl.BlockSpec(prep["b1"].shape, lambda g: (0, 0)),
            pl.BlockSpec(prep["th2"].shape, lambda g: (0, 0, 0)),   # SC2 Theta
            pl.BlockSpec(prep["b2"].shape, lambda g: (0, 0)),
            pl.BlockSpec(prep["th3"].shape, lambda g: (0, 0, 0)),   # SC3 Theta
            pl.BlockSpec(prep["b3"].shape, lambda g: (0, 0)),
            pl.BlockSpec(prep["wh"].shape, lambda g: (0, 0)),       # SGau [loc|scale] head
            pl.BlockSpec(prep["bh"].shape, lambda g: (0, 0)),
        ],
        out_specs=pl.BlockSpec((N, bt * two_t), lambda g: (0, g)),
        compiler_params=_mosaic_params(vmem_hint),
        cost_estimate=pl.CostEstimate(flops=int(flops),
                                      transcendentals=int(2 * B * N * two_t),
                                      bytes_accessed=int(bytes_accessed)),
    )(Xp, A_qf, A_hf, prep["th1"], prep["b1"], prep["th2"], prep["b2"],
      prep["th3"], prep["b3"], prep["wh"], prep["bh"])

    out = jnp.transpose(jnp.reshape(out, (N, B, two_t)), (1, 0, 2))   # (B, N, 2T)
    return out[..., :T], out[..., T:]


# ---------------------------------------------------------------------------
# Pure-JAX reference replicating the PyTorch forward, for correctness checks.
# ---------------------------------------------------------------------------
def _d_gcn_reference(X, A_q, A_h, Theta1, bias, *, orders=ORDERS, activation="relu"):
    B, N, C = X.shape
    K = 2 * orders + 1
    x0 = jnp.reshape(jnp.transpose(X, (1, 2, 0)), (N, C * B))
    xs = [x0]
    cur_x0 = x0
    for A in (A_q, A_h):
        x1 = A @ cur_x0
        xs.append(x1)
        for _ in range(2, orders + 1):
            x2 = 2.0 * (A @ x1) - cur_x0
            xs.append(x2)
            x1, cur_x0 = x2, x1
    x = jnp.stack(xs, axis=0)                     # (K, N, C*B)
    x = jnp.reshape(x, (K, N, C, B))
    x = jnp.transpose(x, (3, 1, 2, 0))            # (B, N, C, K)
    x = jnp.reshape(x, (B, N, C * K))
    x = x @ Theta1 + bias
    if activation == "relu":
        x = jnp.maximum(x, 0.0)
    return x


def _st_gau_reference(X, A_q, A_h, params):
    h = _d_gcn_reference(X, A_q, A_h, params["sc1_theta"], params["sc1_bias"])
    h = _d_gcn_reference(h, A_q, A_h, params["sc2_theta"], params["sc2_bias"])
    h = _d_gcn_reference(h, A_q, A_h, params["sc3_theta"], params["sc3_bias"])
    loc = h @ params["loc_w"] + params["loc_b"]
    s = h @ params["scale_w"] + params["scale_b"]
    scale = jnp.maximum(s, 0.0) + jnp.log1p(jnp.exp(-jnp.abs(s)))
    return loc, scale


if __name__ == "__main__":
    # Small shapes consistent with the module:
    #   X: (batch, num_nodes, num_timesteps); SC1: T->hidden_s, SC2: hidden_s->rank_s,
    #   SC3: rank_s->hidden_s, SGau: hidden_s -> T (loc, scale).
    B, N, T = 2, 16, 8
    hidden_s, rank_s = 32, 16
    K = NUM_MATRICES

    key = jax.random.PRNGKey(0)
    (kx, kq, kh, k1w, k1b, k2w, k2b, k3w, k3b,
     klw, klb, ksw, ksb) = jax.random.split(key, 13)

    X = jax.random.normal(kx, (B, N, T), dtype=jnp.float32)

    # Deterministic row-normalized "random walk" supports.
    Aq_raw = jax.random.uniform(kq, (N, N), dtype=jnp.float32)
    Ah_raw = jax.random.uniform(kh, (N, N), dtype=jnp.float32)
    A_q = Aq_raw / jnp.sum(Aq_raw, axis=1, keepdims=True)
    A_h = Ah_raw / jnp.sum(Ah_raw, axis=1, keepdims=True)

    def init_dgcn(kw, kb, c_in, c_out):
        stdv = 1.0 / math.sqrt(c_out)
        theta = jax.random.uniform(kw, (c_in * K, c_out), dtype=jnp.float32,
                                   minval=-stdv, maxval=stdv)
        b = jax.random.uniform(kb, (c_out,), dtype=jnp.float32,
                               minval=-stdv, maxval=stdv)
        return theta, b

    sc1_theta, sc1_bias = init_dgcn(k1w, k1b, T, hidden_s)
    sc2_theta, sc2_bias = init_dgcn(k2w, k2b, hidden_s, rank_s)
    sc3_theta, sc3_bias = init_dgcn(k3w, k3b, rank_s, hidden_s)

    stdv_g = 1.0 / math.sqrt(T)
    params = dict(
        sc1_theta=sc1_theta, sc1_bias=sc1_bias,
        sc2_theta=sc2_theta, sc2_bias=sc2_bias,
        sc3_theta=sc3_theta, sc3_bias=sc3_bias,
        loc_w=jax.random.uniform(klw, (hidden_s, T), dtype=jnp.float32,
                                 minval=-stdv_g, maxval=stdv_g),
        loc_b=jax.random.uniform(klb, (T,), dtype=jnp.float32,
                                 minval=-stdv_g, maxval=stdv_g),
        scale_w=jax.random.uniform(ksw, (hidden_s, T), dtype=jnp.float32,
                                   minval=-stdv_g, maxval=stdv_g),
        scale_b=jax.random.uniform(ksb, (T,), dtype=jnp.float32,
                                   minval=-stdv_g, maxval=stdv_g),
    )

    # One-time parameter preprocessing (whole batch folded into one tile here).
    prep = prepare_params(params, num_timesteps=T, batch_tile=B)

    loc, scale = st_gau_forward(X, A_q, A_h, prep)
    loc = jax.block_until_ready(loc)
    scale = jax.block_until_ready(scale)

    loc_ref, scale_ref = _st_gau_reference(X, A_q, A_h, params)

    assert loc.shape == (B, N, T), loc.shape
    assert scale.shape == (B, N, T), scale.shape
    assert jnp.allclose(loc, loc_ref, atol=1e-4, rtol=1e-4), "loc mismatch vs reference"
    assert jnp.allclose(scale, scale_ref, atol=1e-4, rtol=1e-4), "scale mismatch vs reference"
    assert bool(jnp.all(scale > 0.0)), "scale must be positive"

    print("KERNEL_OK")
</pallas_src>

<mosaic_0001>
module attributes {stable_mosaic.version = 11 : i64} {
  func.func @_st_gau_kernel(%arg0: i32, %arg1: memref<16x16xf32, #tpu.memory_space<vmem>>, %arg2: memref<16x16xf32, #tpu.memory_space<vmem>>, %arg3: memref<16x16xf32, #tpu.memory_space<vmem>>, %arg4: memref<5x16x64xf32, #tpu.memory_space<vmem>>, %arg5: memref<1x64xf32, #tpu.memory_space<vmem>>, %arg6: memref<5x64x32xf32, #tpu.memory_space<vmem>>, %arg7: memref<1x32xf32, #tpu.memory_space<vmem>>, %arg8: memref<5x32x64xf32, #tpu.memory_space<vmem>>, %arg9: memref<1x64xf32, #tpu.memory_space<vmem>>, %arg10: memref<64x32xf32, #tpu.memory_space<vmem>>, %arg11: memref<1x32xf32, #tpu.memory_space<vmem>>, %arg12: memref<16x32xf32, #tpu.memory_space<vmem>>) attributes {dimension_semantics = [#tpu.dimension_semantics<parallel>], iteration_bounds = array<i64: 1>, scalar_prefetch = 0 : i64, scratch_operands = 0 : i64, tpu.core_type = #tpu.core_type<tc>, window_params = [{transform_indices = @transform_0, window_bounds = array<i64: 16, 16>}, {pipeline_mode = #tpu.pipeline_mode<synchronous>, transform_indices = @transform_1, window_bounds = array<i64: 16, 16>}, {pipeline_mode = #tpu.pipeline_mode<synchronous>, transform_indices = @transform_2, window_bounds = array<i64: 16, 16>}, {pipeline_mode = #tpu.pipeline_mode<synchronous>, transform_indices = @transform_3, window_bounds = array<i64: 5, 16, 64>}, {pipeline_mode = #tpu.pipeline_mode<synchronous>, transform_indices = @transform_4, window_bounds = array<i64: 1, 64>}, {pipeline_mode = #tpu.pipeline_mode<synchronous>, transform_indices = @transform_5, window_bounds = array<i64: 5, 64, 32>}, {pipeline_mode = #tpu.pipeline_mode<synchronous>, transform_indices = @transform_6, window_bounds = array<i64: 1, 32>}, {pipeline_mode = #tpu.pipeline_mode<synchronous>, transform_indices = @transform_7, window_bounds = array<i64: 5, 32, 64>}, {pipeline_mode = #tpu.pipeline_mode<synchronous>, transform_indices = @transform_8, window_bounds = array<i64: 1, 64>}, {pipeline_mode = #tpu.pipeline_mode<synchronous>, transform_indices = @transform_9, window_bounds = array<i64: 64, 32>}, {pipeline_mode = #tpu.pipeline_mode<synchronous>, transform_indices = @transform_10, window_bounds = array<i64: 1, 32>}, {transform_indices = @transform_11, window_bounds = array<i64: 16, 32>}]} {
    %c0 = arith.constant 0 : index
    %c0_0 = arith.constant 0 : index
    %0 = vector.load %arg2[%c0, %c0_0] : memref<16x16xf32, #tpu.memory_space<vmem>>, vector<16x16xf32>
    %c0_1 = arith.constant 0 : index
    %c0_2 = arith.constant 0 : index
    %1 = vector.load %arg3[%c0_1, %c0_2] : memref<16x16xf32, #tpu.memory_space<vmem>>, vector<16x16xf32>
    %c0_3 = arith.constant 0 : index
    %c0_4 = arith.constant 0 : index
    %2 = vector.load %arg1[%c0_3, %c0_4] : memref<16x16xf32, #tpu.memory_space<vmem>>, vector<16x16xf32>
    %c0_5 = arith.constant 0 : index
    %c0_6 = arith.constant 0 : index
    %c0_7 = arith.constant 0 : index
    %3 = vector.load %arg4[%c0_5, %c0_6, %c0_7] : memref<5x16x64xf32, #tpu.memory_space<vmem>>, vector<1x16x64xf32>
    %4 = vector.shape_cast %3 : vector<1x16x64xf32> to vector<16x64xf32>
    %cst = arith.constant dense<0.000000e+00> : vector<16x64xf32>
    %5 = tpu.matmul %2, %4, %cst {dimension_numbers = #tpu.dot_dimension_numbers<[1], [0], [0], [1], [0, 0, 1, 1], [], []>} : vector<16x16xf32>, vector<16x64xf32>, vector<16x64xf32> -> vector<16x64xf32>
    %cst_8 = arith.constant dense<0.000000e+00> : vector<16x16xf32>
    %6 = tpu.matmul %0, %2, %cst_8 {dimension_numbers = #tpu.dot_dimension_numbers<[1], [0], [0], [1], [0, 0, 1, 1], [], []>} : vector<16x16xf32>, vector<16x16xf32>, vector<16x16xf32> -> vector<16x16xf32>
    %c1 = arith.constant 1 : index
    %c0_9 = arith.constant 0 : index
    %c0_10 = arith.constant 0 : index
    %7 = vector.load %arg4[%c1, %c0_9, %c0_10] : memref<5x16x64xf32, #tpu.memory_space<vmem>>, vector<1x16x64xf32>
    %8 = vector.shape_cast %7 : vector<1x16x64xf32> to vector<16x64xf32>
    %cst_11 = arith.constant dense<0.000000e+00> : vector<16x64xf32>
    %9 = tpu.matmul %6, %8, %cst_11 {dimension_numbers = #tpu.dot_dimension_numbers<[1], [0], [0], [1], [0, 0, 1, 1], [], []>} : vector<16x16xf32>, vector<16x64xf32>, vector<16x64xf32> -> vector<16x64xf32>
    %10 = arith.addf %5, %9 : vector<16x64xf32>
    %cst_12 = arith.constant dense<0.000000e+00> : vector<16x16xf32>
    %11 = tpu.matmul %0, %6, %cst_12 {dimension_numbers = #tpu.dot_dimension_numbers<[1], [0], [0], [1], [0, 0, 1, 1], [], []>} : vector<16x16xf32>, vector<16x16xf32>, vector<16x16xf32> -> vector<16x16xf32>
    %cst_13 = arith.constant 2.000000e+00 : f32
    %12 = vector.broadcast %cst_13 : f32 to vector<16x16xf32>
    %13 = arith.mulf %12, %11 : vector<16x16xf32>
    %14 = arith.subf %13, %2 : vector<16x16xf32>
    %c2 = arith.constant 2 : index
    %c0_14 = arith.constant 0 : index
    %c0_15 = arith.constant 0 : index
    %15 = vector.load %arg4[%c2, %c0_14, %c0_15] : memref<5x16x64xf32, #tpu.memory_space<vmem>>, vector<1x16x64xf32>
    %16 = vector.shape_cast %15 : vector<1x16x64xf32> to vector<16x64xf32>
    %cst_16 = arith.constant dense<0.000000e+00> : vector<16x64xf32>
    %17 = tpu.matmul %14, %16, %cst_16 {dimension_numbers = #tpu.dot_dimension_numbers<[1], [0], [0], [1], [0, 0, 1, 1], [], []>} : vector<16x16xf32>, vector<16x64xf32>, vector<16x64xf32> -> vector<16x64xf32>
    %18 = arith.addf %10, %17 : vector<16x64xf32>
    %cst_17 = arith.constant dense<0.000000e+00> : vector<16x16xf32>
    %19 = tpu.matmul %1, %6, %cst_17 {dimension_numbers = #tpu.dot_dimension_numbers<[1], [0], [0], [1], [0, 0, 1, 1], [], []>} : vector<16x16xf32>, vector<16x16xf32>, vector<16x16xf32> -> vector<16x16xf32>
    %c3 = arith.constant 3 : index
    %c0_18 = arith.constant 0 : index
    %c0_19 = arith.constant 0 : index
    %20 = vector.load %arg4[%c3, %c0_18, %c0_19] : memref<5x16x64xf32, #tpu.memory_space<vmem>>, vector<1x16x64xf32>
    %21 = vector.shape_cast %20 : vector<1x16x64xf32> to vector<16x64xf32>
    %cst_20 = arith.constant dense<0.000000e+00> : vector<16x64xf32>
    %22 = tpu.matmul %19, %21, %cst_20 {dimension_numbers = #tpu.dot_dimension_numbers<[1], [0], [0], [1], [0, 0, 1, 1], [], []>} : vector<16x16xf32>, vector<16x64xf32>, vector<16x64xf32> -> vector<16x64xf32>
    %23 = arith.addf %18, %22 : vector<16x64xf32>
    %cst_21 = arith.constant dense<0.000000e+00> : vector<16x16xf32>
    %24 = tpu.matmul %1, %19, %cst_21 {dimension_numbers = #tpu.dot_dimension_numbers<[1], [0], [0], [1], [0, 0, 1, 1], [], []>} : vector<16x16xf32>, vector<16x16xf32>, vector<16x16xf32> -> vector<16x16xf32>
    %cst_22 = arith.constant 2.000000e+00 : f32
    %25 = vector.broadcast %cst_22 : f32 to vector<16x16xf32>
    %26 = arith.mulf %25, %24 : vector<16x16xf32>
    %27 = arith.subf %26, %6 : vector<16x16xf32>
    %c4 = arith.constant 4 : index
    %c0_23 = arith.constant 0 : index
    %c0_24 = arith.constant 0 : index
    %28 = vector.load %arg4[%c4, %c0_23, %c0_24] : memref<5x16x64xf32, #tpu.memory_space<vmem>>, vector<1x16x64xf32>
    %29 = vector.shape_cast %28 : vector<1x16x64xf32> to vector<16x64xf32>
    %cst_25 = arith.constant dense<0.000000e+00> : vector<16x64xf32>
    %30 = tpu.matmul %27, %29, %cst_25 {dimension_numbers = #tpu.dot_dimension_numbers<[1], [0], [0], [1], [0, 0, 1, 1], [], []>} : vector<16x16xf32>, vector<16x64xf32>, vector<16x64xf32> -> vector<16x64xf32>
    %31 = arith.addf %23, %30 : vector<16x64xf32>
    %c0_26 = arith.constant 0 : index
    %c0_27 = arith.constant 0 : index
    %32 = vector.load %arg5[%c0_26, %c0_27] : memref<1x64xf32, #tpu.memory_space<vmem>>, vector<1x64xf32>
    %33 = vector.broadcast %32 : vector<1x64xf32> to vector<16x64xf32>
    %34 = arith.addf %31, %33 : vector<16x64xf32>
    %cst_28 = arith.constant 0.000000e+00 : f32
    %35 = vector.broadcast %cst_28 : f32 to vector<16x64xf32>
    %36 = arith.maximumf %34, %35 : vector<16x64xf32>
    %c0_29 = arith.constant 0 : index
    %c0_30 = arith.constant 0 : index
    %c0_31 = arith.constant 0 : index
    %37 = vector.load %arg6[%c0_29, %c0_30, %c0_31] : memref<5x64x32xf32, #tpu.memory_space<vmem>>, vector<1x64x32xf32>
    %38 = vector.shape_cast %37 : vector<1x64x32xf32> to vector<64x32xf32>
    %cst_32 = arith.constant dense<0.000000e+00> : vector<16x32xf32>
    %39 = tpu.matmul %36, %38, %cst_32 {dimension_numbers = #tpu.dot_dimension_numbers<[1], [0], [0], [1], [0, 0, 1, 1], [], []>} : vector<16x64xf32>, vector<64x32xf32>, vector<16x32xf32> -> vector<16x32xf32>
    %cst_33 = arith.constant dense<0.000000e+00> : vector<16x64xf32>
    %40 = tpu.matmul %0, %36, %cst_33 {dimension_numbers = #tpu.dot_dimension_numbers<[1], [0], [0], [1], [0, 0, 1, 1], [], []>} : vector<16x16xf32>, vector<16x64xf32>, vector<16x64xf32> -> vector<16x64xf32>
    %c1_34 = arith.constant 1 : index
    %c0_35 = arith.constant 0 : index
    %c0_36 = arith.constant 0 : index
    %41 = vector.load %arg6[%c1_34, %c0_35, %c0_36] : memref<5x64x32xf32, #tpu.memory_space<vmem>>, vector<1x64x32xf32>
    %42 = vector.shape_cast %41 : vector<1x64x32xf32> to vector<64x32xf32>
    %cst_37 = arith.constant dense<0.000000e+00> : vector<16x32xf32>
    %43 = tpu.matmul %40, %42, %cst_37 {dimension_numbers = #tpu.dot_dimension_numbers<[1], [0], [0], [1], [0, 0, 1, 1], [], []>} : vector<16x64xf32>, vector<64x32xf32>, vector<16x32xf32> -> vector<16x32xf32>
    %44 = arith.addf %39, %43 : vector<16x32xf32>
    %cst_38 = arith.constant dense<0.000000e+00> : vector<16x64xf32>
    %45 = tpu.matmul %0, %40, %cst_38 {dimension_numbers = #tpu.dot_dimension_numbers<[1], [0], [0], [1], [0, 0, 1, 1], [], []>} : vector<16x16xf32>, vector<16x64xf32>, vector<16x64xf32> -> vector<16x64xf32>
    %cst_39 = arith.constant 2.000000e+00 : f32
    %46 = vector.broadcast %cst_39 : f32 to vector<16x64xf32>
    %47 = arith.mulf %46, %45 : vector<16x64xf32>
    %48 = arith.subf %47, %36 : vector<16x64xf32>
    %c2_40 = arith.constant 2 : index
    %c0_41 = arith.constant 0 : index
    %c0_42 = arith.constant 0 : index
    %49 = vector.load %arg6[%c2_40, %c0_41, %c0_42] : memref<5x64x32xf32, #tpu.memory_space<vmem>>, vector<1x64x32xf32>
    %50 = vector.shape_cast %49 : vector<1x64x32xf32> to vector<64x32xf32>
    %cst_43 = arith.constant dense<0.000000e+00> : vector<16x32xf32>
    %51 = tpu.matmul %48, %50, %cst_43 {dimension_numbers = #tpu.dot_dimension_numbers<[1], [0], [0], [1], [0, 0, 1, 1], [], []>} : vector<16x64xf32>, vector<64x32xf32>, vector<16x32xf32> -> vector<16x32xf32>
    %52 = arith.addf %44, %51 : vector<16x32xf32>
    %cst_44 = arith.constant dense<0.000000e+00> : vector<16x64xf32>
    %53 = tpu.matmul %1, %40, %cst_44 {dimension_numbers = #tpu.dot_dimension_numbers<[1], [0], [0], [1], [0, 0, 1, 1], [], []>} : vector<16x16xf32>, vector<16x64xf32>, vector<16x64xf32> -> vector<16x64xf32>
    %c3_45 = arith.constant 3 : index
    %c0_46 = arith.constant 0 : index
    %c0_47 = arith.constant 0 : index
    %54 = vector.load %arg6[%c3_45, %c0_46, %c0_47] : memref<5x64x32xf32, #tpu.memory_space<vmem>>, vector<1x64x32xf32>
    %55 = vector.shape_cast %54 : vector<1x64x32xf32> to vector<64x32xf32>
    %cst_48 = arith.constant dense<0.000000e+00> : vector<16x32xf32>
    %56 = tpu.matmul %53, %55, %cst_48 {dimension_numbers = #tpu.dot_dimension_numbers<[1], [0], [0], [1], [0, 0, 1, 1], [], []>} : vector<16x64xf32>, vector<64x32xf32>, vector<16x32xf32> -> vector<16x32xf32>
    %57 = arith.addf %52, %56 : vector<16x32xf32>
    %cst_49 = arith.constant dense<0.000000e+00> : vector<16x64xf32>
    %58 = tpu.matmul %1, %53, %cst_49 {dimension_numbers = #tpu.dot_dimension_numbers<[1], [0], [0], [1], [0, 0, 1, 1], [], []>} : vector<16x16xf32>, vector<16x64xf32>, vector<16x64xf32> -> vector<16x64xf32>
    %cst_50 = arith.constant 2.000000e+00 : f32
    %59 = vector.broadcast %cst_50 : f32 to vector<16x64xf32>
    %60 = arith.mulf %59, %58 : vector<16x64xf32>
    %61 = arith.subf %60, %40 : vector<16x64xf32>
    %c4_51 = arith.constant 4 : index
    %c0_52 = arith.constant 0 : index
    %c0_53 = arith.constant 0 : index
    %62 = vector.load %arg6[%c4_51, %c0_52, %c0_53] : memref<5x64x32xf32, #tpu.memory_space<vmem>>, vector<1x64x32xf32>
    %63 = vector.shape_cast %62 : vector<1x64x32xf32> to vector<64x32xf32>
    %cst_54 = arith.constant dense<0.000000e+00> : vector<16x32xf32>
    %64 = tpu.matmul %61, %63, %cst_54 {dimension_numbers = #tpu.dot_dimension_numbers<[1], [0], [0], [1], [0, 0, 1, 1], [], []>} : vector<16x64xf32>, vector<64x32xf32>, vector<16x32xf32> -> vector<16x32xf32>
    %65 = arith.addf %57, %64 : vector<16x32xf32>
    %c0_55 = arith.constant 0 : index
    %c0_56 = arith.constant 0 : index
    %66 = vector.load %arg7[%c0_55, %c0_56] : memref<1x32xf32, #tpu.memory_space<vmem>>, vector<1x32xf32>
    %67 = vector.broadcast %66 : vector<1x32xf32> to vector<16x32xf32>
    %68 = arith.addf %65, %67 : vector<16x32xf32>
    %cst_57 = arith.constant 0.000000e+00 : f32
    %69 = vector.broadcast %cst_57 : f32 to vector<16x32xf32>
    %70 = arith.maximumf %68, %69 : vector<16x32xf32>
    %c0_58 = arith.constant 0 : index
    %c0_59 = arith.constant 0 : index
    %c0_60 = arith.constant 0 : index
    %71 = vector.load %arg8[%c0_58, %c0_59, %c0_60] : memref<5x32x64xf32, #tpu.memory_space<vmem>>, vector<1x32x64xf32>
    %72 = vector.shape_cast %71 : vector<1x32x64xf32> to vector<32x64xf32>
    %cst_61 = arith.constant dense<0.000000e+00> : vector<16x64xf32>
    %73 = tpu.matmul %70, %72, %cst_61 {dimension_numbers = #tpu.dot_dimension_numbers<[1], [0], [0], [1], [0, 0, 1, 1], [], []>} : vector<16x32xf32>, vector<32x64xf32>, vector<16x64xf32> -> vector<16x64xf32>
    %cst_62 = arith.constant dense<0.000000e+00> : vector<16x32xf32>
    %74 = tpu.matmul %0, %70, %cst_62 {dimension_numbers = #tpu.dot_dimension_numbers<[1], [0], [0], [1], [0, 0, 1, 1], [], []>} : vector<16x16xf32>, vector<16x32xf32>, vector<16x32xf32> -> vector<16x32xf32>
    %c1_63 = arith.constant 1 : index
    %c0_64 = arith.constant 0 : index
    %c0_65 = arith.constant 0 : index
    %75 = vector.load %arg8[%c1_63, %c0_64, %c0_65] : memref<5x32x64xf32, #tpu.memory_space<vmem>>, vector<1x32x64xf32>
    %76 = vector.shape_cast %75 : vector<1x32x64xf32> to vector<32x64xf32>
    %cst_66 = arith.constant dense<0.000000e+00> : vector<16x64xf32>
    %77 = tpu.matmul %74, %76, %cst_66 {dimension_numbers = #tpu.dot_dimension_numbers<[1], [0], [0], [1], [0, 0, 1, 1], [], []>} : vector<16x32xf32>, vector<32x64xf32>, vector<16x64xf32> -> vector<16x64xf32>
    %78 = arith.addf %73, %77 : vector<16x64xf32>
    %cst_67 = arith.constant dense<0.000000e+00> : vector<16x32xf32>
    %79 = tpu.matmul %0, %74, %cst_67 {dimension_numbers = #tpu.dot_dimension_numbers<[1], [0], [0], [1], [0, 0, 1, 1], [], []>} : vector<16x16xf32>, vector<16x32xf32>, vector<16x32xf32> -> vector<16x32xf32>
    %cst_68 = arith.constant 2.000000e+00 : f32
    %80 = vector.broadcast %cst_68 : f32 to vector<16x32xf32>
    %81 = arith.mulf %80, %79 : vector<16x32xf32>
    %82 = arith.subf %81, %70 : vector<16x32xf32>
    %c2_69 = arith.constant 2 : index
    %c0_70 = arith.constant 0 : index
    %c0_71 = arith.constant 0 : index
    %83 = vector.load %arg8[%c2_69, %c0_70, %c0_71] : memref<5x32x64xf32, #tpu.memory_space<vmem>>, vector<1x32x64xf32>
    %84 = vector.shape_cast %83 : vector<1x32x64xf32> to vector<32x64xf32>
    %cst_72 = arith.constant dense<0.000000e+00> : vector<16x64xf32>
    %85 = tpu.matmul %82, %84, %cst_72 {dimension_numbers = #tpu.dot_dimension_numbers<[1], [0], [0], [1], [0, 0, 1, 1], [], []>} : vector<16x32xf32>, vector<32x64xf32>, vector<16x64xf32> -> vector<16x64xf32>
    %86 = arith.addf %78, %85 : vector<16x64xf32>
    %cst_73 = arith.constant dense<0.000000e+00> : vector<16x32xf32>
    %87 = tpu.matmul %1, %74, %cst_73 {dimension_numbers = #tpu.dot_dimension_numbers<[1], [0], [0], [1], [0, 0, 1, 1], [], []>} : vector<16x16xf32>, vector<16x32xf32>, vector<16x32xf32> -> vector<16x32xf32>
    %c3_74 = arith.constant 3 : index
    %c0_75 = arith.constant 0 : index
    %c0_76 = arith.constant 0 : index
    %88 = vector.load %arg8[%c3_74, %c0_75, %c0_76] : memref<5x32x64xf32, #tpu.memory_space<vmem>>, vector<1x32x64xf32>
    %89 = vector.shape_cast %88 : vector<1x32x64xf32> to vector<32x64xf32>
    %cst_77 = arith.constant dense<0.000000e+00> : vector<16x64xf32>
    %90 = tpu.matmul %87, %89, %cst_77 {dimension_numbers = #tpu.dot_dimension_numbers<[1], [0], [0], [1], [0, 0, 1, 1], [], []>} : vector<16x32xf32>, vector<32x64xf32>, vector<16x64xf32> -> vector<16x64xf32>
    %91 = arith.addf %86, %90 : vector<16x64xf32>
    %cst_78 = arith.constant dense<0.000000e+00> : vector<16x32xf32>
    %92 = tpu.matmul %1, %87, %cst_78 {dimension_numbers = #tpu.dot_dimension_numbers<[1], [0], [0], [1], [0, 0, 1, 1], [], []>} : vector<16x16xf32>, vector<16x32xf32>, vector<16x32xf32> -> vector<16x32xf32>
    %cst_79 = arith.constant 2.000000e+00 : f32
    %93 = vector.broadcast %cst_79 : f32 to vector<16x32xf32>
    %94 = arith.mulf %93, %92 : vector<16x32xf32>
    %95 = arith.subf %94, %74 : vector<16x32xf32>
    %c4_80 = arith.constant 4 : index
    %c0_81 = arith.constant 0 : index
    %c0_82 = arith.constant 0 : index
    %96 = vector.load %arg8[%c4_80, %c0_81, %c0_82] : memref<5x32x64xf32, #tpu.memory_space<vmem>>, vector<1x32x64xf32>
    %97 = vector.shape_cast %96 : vector<1x32x64xf32> to vector<32x64xf32>
    %cst_83 = arith.constant dense<0.000000e+00> : vector<16x64xf32>
    %98 = tpu.matmul %95, %97, %cst_83 {dimension_numbers = #tpu.dot_dimension_numbers<[1], [0], [0], [1], [0, 0, 1, 1], [], []>} : vector<16x32xf32>, vector<32x64xf32>, vector<16x64xf32> -> vector<16x64xf32>
    %99 = arith.addf %91, %98 : vector<16x64xf32>
    %c0_84 = arith.constant 0 : index
    %c0_85 = arith.constant 0 : index
    %100 = vector.load %arg9[%c0_84, %c0_85] : memref<1x64xf32, #tpu.memory_space<vmem>>, vector<1x64xf32>
    %101 = vector.broadcast %100 : vector<1x64xf32> to vector<16x64xf32>
    %102 = arith.addf %99, %101 : vector<16x64xf32>
    %cst_86 = arith.constant 0.000000e+00 : f32
    %103 = vector.broadcast %cst_86 : f32 to vector<16x64xf32>
    %104 = arith.maximumf %102, %103 : vector<16x64xf32>
    %c0_87 = arith.constant 0 : index
    %c0_88 = arith.constant 0 : index
    %105 = vector.load %arg10[%c0_87, %c0_88] : memref<64x32xf32, #tpu.memory_space<vmem>>, vector<64x32xf32>
    %cst_89 = arith.constant dense<0.000000e+00> : vector<16x32xf32>
    %106 = tpu.matmul %104, %105, %cst_89 {dimension_numbers = #tpu.dot_dimension_numbers<[1], [0], [0], [1], [0, 0, 1, 1], [], []>} : vector<16x64xf32>, vector<64x32xf32>, vector<16x32xf32> -> vector<16x32xf32>
    %c0_90 = arith.constant 0 : index
    %c0_91 = arith.constant 0 : index
    %107 = vector.load %arg11[%c0_90, %c0_91] : memref<1x32xf32, #tpu.memory_space<vmem>>, vector<1x32xf32>
    %108 = vector.broadcast %107 : vector<1x32xf32> to vector<16x32xf32>
    %109 = arith.addf %106, %108 : vector<16x32xf32>
    %110 = tpu.iota {dimensions = array<i32: 1>} : vector<16x32xi32>
    %c16_i32 = arith.constant 16 : i32
    %c0_i32 = arith.constant 0 : i32
    %111 = arith.cmpi eq, %c16_i32, %c0_i32 : i32
    %c1_i32 = arith.constant 1 : i32
    %112 = arith.select %111, %c1_i32, %c16_i32 : i32
    %113 = vector.broadcast %112 : i32 to vector<16x32xi32>
    %114 = arith.remsi %110, %113 : vector<16x32xi32>
    %c0_i32_92 = arith.constant 0 : i32
    %115 = vector.broadcast %c0_i32_92 : i32 to vector<16x32xi32>
    %116 = arith.cmpi ne, %114, %115 : vector<16x32xi32>
    %c0_i32_93 = arith.constant 0 : i32
    %117 = vector.broadcast %c0_i32_93 : i32 to vector<16x32xi32>
    %118 = arith.cmpi slt, %114, %117 : vector<16x32xi32>
    %c0_i32_94 = arith.constant 0 : i32
    %119 = arith.cmpi slt, %112, %c0_i32_94 : i32
    %120 = vector.broadcast %119 : i1 to vector<16x32xi1>
    %121 = vector.broadcast %120 : vector<16x32xi1> to vector<16x32xi1>
    %122 = arith.xori %118, %121 : vector<16x32xi1>
    %123 = arith.andi %122, %116 : vector<16x32xi1>
    %124 = vector.broadcast %112 : i32 to vector<16x32xi32>
    %125 = arith.addi %114, %124 : vector<16x32xi32>
    %126 = arith.select %123, %125, %114 : vector<16x32xi1>, vector<16x32xi32>
    %c8_i32 = arith.constant 8 : i32
    %127 = vector.broadcast %c8_i32 : i32 to vector<16x32xi32>
    %128 = arith.cmpi sge, %126, %127 : vector<16x32xi32>
    %cst_95 = arith.constant 0.000000e+00 : f32
    %129 = vector.broadcast %cst_95 : f32 to vector<16x32xf32>
    %130 = arith.maximumf %109, %129 : vector<16x32xf32>
    %131 = math.absf %109 : vector<16x32xf32>
    %cst_96 = arith.constant 0.000000e+00 : f32
    %132 = vector.broadcast %cst_96 : f32 to vector<16x32xf32>
    %133 = arith.subf %132, %131 : vector<16x32xf32>
    %134 = math.exp %133 : vector<16x32xf32>
    %135 = math.log1p %134 : vector<16x32xf32>
    %136 = arith.addf %130, %135 : vector<16x32xf32>
    %137 = arith.select %128, %136, %109 : vector<16x32xi1>, vector<16x32xf32>
    %c0_97 = arith.constant 0 : index
    %c0_98 = arith.constant 0 : index
    %138 = vector.load %arg12[%c0_97, %c0_98] : memref<16x32xf32, #tpu.memory_space<vmem>>, vector<16x32xf32>
    tpu.vector_store %arg12[%c0_97, %c0_98], %137 {strides = array<i32>} : memref<16x32xf32, #tpu.memory_space<vmem>>, vector<16x32xf32>,
    return
  }
  func.func @transform_0(%arg0: i32) -> (i32, i32) {
    %c0_i32 = arith.constant 0 : i32
    %c0_i32_0 = arith.constant 0 : i32
    return %c0_i32, %arg0 : i32, i32
  }
  func.func @transform_1(%arg0: i32) -> (i32, i32) {
    %c0_i32 = arith.constant 0 : i32
    %c0_i32_0 = arith.constant 0 : i32
    %c0_i32_1 = arith.constant 0 : i32
    return %c0_i32, %c0_i32_0 : i32, i32
  }
  func.func @transform_2(%arg0: i32) -> (i32, i32) {
    %c0_i32 = arith.constant 0 : i32
    %c0_i32_0 = arith.constant 0 : i32
    %c0_i32_1 = arith.constant 0 : i32
    return %c0_i32, %c0_i32_0 : i32, i32
  }
  func.func @transform_3(%arg0: i32) -> (i32, i32, i32) {
    %c0_i32 = arith.constant 0 : i32
    %c0_i32_0 = arith.constant 0 : i32
    %c0_i32_1 = arith.constant 0 : i32
    %c0_i32_2 = arith.constant 0 : i32
    return %c0_i32, %c0_i32_0, %c0_i32_1 : i32, i32, i32
  }
  func.func @transform_4(%arg0: i32) -> (i32, i32) {
    %c0_i32 = arith.constant 0 : i32
    %c0_i32_0 = arith.constant 0 : i32
    %c0_i32_1 = arith.constant 0 : i32
    return %c0_i32, %c0_i32_0 : i32, i32
  }
  func.func @transform_5(%arg0: i32) -> (i32, i32, i32) {
    %c0_i32 = arith.constant 0 : i32
    %c0_i32_0 = arith.constant 0 : i32
    %c0_i32_1 = arith.constant 0 : i32
    %c0_i32_2 = arith.constant 0 : i32
    return %c0_i32, %c0_i32_0, %c0_i32_1 : i32, i32, i32
  }
  func.func @transform_6(%arg0: i32) -> (i32, i32) {
    %c0_i32 = arith.constant 0 : i32
    %c0_i32_0 = arith.constant 0 : i32
    %c0_i32_1 = arith.constant 0 : i32
    return %c0_i32, %c0_i32_0 : i32, i32
  }
  func.func @transform_7(%arg0: i32) -> (i32, i32, i32) {
    %c0_i32 = arith.constant 0 : i32
    %c0_i32_0 = arith.constant 0 : i32
    %c0_i32_1 = arith.constant 0 : i32
    %c0_i32_2 = arith.constant 0 : i32
    return %c0_i32, %c0_i32_0, %c0_i32_1 : i32, i32, i32
  }
  func.func @transform_8(%arg0: i32) -> (i32, i32) {
    %c0_i32 = arith.constant 0 : i32
    %c0_i32_0 = arith.constant 0 : i32
    %c0_i32_1 = arith.constant 0 : i32
    return %c0_i32, %c0_i32_0 : i32, i32
  }
  func.func @transform_9(%arg0: i32) -> (i32, i32) {
    %c0_i32 = arith.constant 0 : i32
    %c0_i32_0 = arith.constant 0 : i32
    %c0_i32_1 = arith.constant 0 : i32
    return %c0_i32, %c0_i32_0 : i32, i32
  }
  func.func @transform_10(%arg0: i32) -> (i32, i32) {
    %c0_i32 = arith.constant 0 : i32
    %c0_i32_0 = arith.constant 0 : i32
    %c0_i32_1 = arith.constant 0 : i32
    return %c0_i32, %c0_i32_0 : i32, i32
  }
  func.func @transform_11(%arg0: i32) -> (i32, i32) {
    %c0_i32 = arith.constant 0 : i32
    %c0_i32_0 = arith.constant 0 : i32
    return %c0_i32, %arg0 : i32, i32
  }
}

</mosaic_0001>

<llo_original>
// kernel: tpu_custom_call.1
$region0: #{tpu_custom_call.1}
  #allocation0 [shape = 'u32[]', space=smem, size = 0x4, offset = 0x4, fixed_abs, tag = 'smem constant byte address 0x4 - core index']
  #allocation1 [shape = 'u32[144,128]{1,0:T(1,128)}', space=vmem, size = 0x12000, scoped, tag = 'internal scratch']
  %s0 = inlined_call_operand.vmem [shape: f32[16,16], index: 0, kind: input, shape index: {}]
  %s1 = inlined_call_operand.vmem [shape: f32[16,16], index: 1, kind: input, shape index: {}]
  %s2 = inlined_call_operand.vmem [shape: f32[16,16], index: 2, kind: input, shape index: {}]
  %s3 = inlined_call_operand.vmem [shape: f32[5,16,64], index: 3, kind: input, shape index: {}]
  %s4 = inlined_call_operand.vmem [shape: f32[1,64], index: 4, kind: input, shape index: {}]
  %s5 = inlined_call_operand.vmem [shape: f32[5,64,32], index: 5, kind: input, shape index: {}]
  %s6 = inlined_call_operand.vmem [shape: f32[1,32], index: 6, kind: input, shape index: {}]
  %s7 = inlined_call_operand.vmem [shape: f32[5,32,64], index: 7, kind: input, shape index: {}]
  %s8 = inlined_call_operand.vmem [shape: f32[1,64], index: 8, kind: input, shape index: {}]
  %s9 = inlined_call_operand.vmem [shape: f32[64,32], index: 9, kind: input, shape index: {}]
  %s10 = inlined_call_operand.vmem [shape: f32[1,32], index: 10, kind: input, shape index: {}]
  %s11 = inlined_call_operand.hbm [shape: f32[16,32], index: 11, kind: output, shape index: {}]
  %s12 = sld [smem:[#allocation0]]
  $region54: #{tpu_custom_call.1} parent=0
    _
  %s14 = ssub.s32 1, %s12
  %s15 = scalar_select 0, %s14, %s12
  $region1: #{tpu_custom_call.1} parent=0
    #allocation2 [shape = 'u8[8192]{0}', space=vmem, size = 0x2000, scoped, tag = 'output window, operand 0, single buffered']
    #allocation3 [shape = 's32[1]{0}', space=sflag, size = 0x4, scoped, tag = 'scoped memory for tpu_custom_call.1']
    %16 = vsyncpa [#allocation3], 0
    // Predicated region
    $region2: #{tpu_custom_call.1} parent=1 // pred_check
      _
    $region3: #{tpu_custom_call.1} parent=1 // pred_check_branch
      %18 = sbr.rel (0) target = $region5
    $region4: #{tpu_custom_call.1} parent=1 // pred_region
      _
    $region5: #{tpu_custom_call.1} parent=1 // pred_fallthru
      _
    // Predicated region
    $region6: #{tpu_custom_call.1} parent=1 // pred_check
      _
    $region7: #{tpu_custom_call.1} parent=1 // pred_check_branch
      %20 = sbr.rel (0) target = $region9
    $region8: #{tpu_custom_call.1} parent=1 // pred_region
      _
    $region9: #{tpu_custom_call.1} parent=1 // pred_fallthru
      _
    // Predicated region
    $region10: #{tpu_custom_call.1} parent=1 // pred_check
      _
    $region11: #{tpu_custom_call.1} parent=1 // pred_check_branch
      %22 = sbr.rel (0) target = $region13
    $region12: #{tpu_custom_call.1} parent=1 // pred_region
      _
    $region13: #{tpu_custom_call.1} parent=1 // pred_fallthru
      _
    // Predicated region
    $region14: #{tpu_custom_call.1} parent=1 // pred_check
      _
    $region15: #{tpu_custom_call.1} parent=1 // pred_check_branch
      %24 = sbr.rel (0) target = $region17
    $region16: #{tpu_custom_call.1} parent=1 // pred_region
      _
    $region17: #{tpu_custom_call.1} parent=1 // pred_fallthru
      _
    // Predicated region
    $region18: #{tpu_custom_call.1} parent=1 // pred_check
      _
    $region19: #{tpu_custom_call.1} parent=1 // pred_check_branch
      %26 = sbr.rel (0) target = $region21
    $region20: #{tpu_custom_call.1} parent=1 // pred_region
      _
    $region21: #{tpu_custom_call.1} parent=1 // pred_fallthru
      _
    // Predicated region
    $region22: #{tpu_custom_call.1} parent=1 // pred_check
      _
    $region23: #{tpu_custom_call.1} parent=1 // pred_check_branch
      %28 = sbr.rel (0) target = $region25
    $region24: #{tpu_custom_call.1} parent=1 // pred_region
      _
    $region25: #{tpu_custom_call.1} parent=1 // pred_fallthru
      _
    // Predicated region
    $region26: #{tpu_custom_call.1} parent=1 // pred_check
      _
    $region27: #{tpu_custom_call.1} parent=1 // pred_check_branch
      %30 = sbr.rel (0) target = $region29
    $region28: #{tpu_custom_call.1} parent=1 // pred_region
      _
    $region29: #{tpu_custom_call.1} parent=1 // pred_fallthru
      _
    // Predicated region
    $region30: #{tpu_custom_call.1} parent=1 // pred_check
      _
    $region31: #{tpu_custom_call.1} parent=1 // pred_check_branch
      %32 = sbr.rel (0) target = $region33
    $region32: #{tpu_custom_call.1} parent=1 // pred_region
      _
    $region33: #{tpu_custom_call.1} parent=1 // pred_fallthru
      _
    // Predicated region
    $region34: #{tpu_custom_call.1} parent=1 // pred_check
      _
    $region35: #{tpu_custom_call.1} parent=1 // pred_check_branch
      %34 = sbr.rel (0) target = $region37
    $region36: #{tpu_custom_call.1} parent=1 // pred_region
      _
    $region37: #{tpu_custom_call.1} parent=1 // pred_fallthru
      _
    // Predicated region
    $region38: #{tpu_custom_call.1} parent=1 // pred_check
      _
    $region39: #{tpu_custom_call.1} parent=1 // pred_check_branch
      %36 = sbr.rel (0) target = $region41
    $region40: #{tpu_custom_call.1} parent=1 // pred_region
      _
    $region41: #{tpu_custom_call.1} parent=1 // pred_fallthru
      _
    // Predicated region
    $region42: #{tpu_custom_call.1} parent=1 // pred_check
      _
    $region43: #{tpu_custom_call.1} parent=1 // pred_check_branch
      %38 = sbr.rel (0) target = $region45
    $region44: #{tpu_custom_call.1} parent=1 // pred_region
      _
    $region45: #{tpu_custom_call.1} parent=1 // pred_fallthru
      _
    %v39 = vld [vmem:[%s1] sm:$0xff]
    %v40 = vld [vmem:[%s1 + $0x8] sm:$0xff]
    %v41 = vld [vmem:[%s2] sm:$0xff]
    %v42 = vld [vmem:[%s2 + $0x8] sm:$0xff]
    %v43 = vld [vmem:[%s0] sm:$0xff]
    %v44 = vld [vmem:[%s0 + $0x8] sm:$0xff]
    %v45 = vld [vmem:[%s3] sm:$0xff]
    %v46 = vld [vmem:[%s3 + $0x8] sm:$0xff]
    %vm47 = vcmask 130048
    %v49 = vsel %vm47, %v39, 0
    %v52 = vsel %vm47, %v40, 0
    %54 = vmatprep.subr.mxu0 0.0
    %55 = vmatpush1.msra.mxu0 %v43
    %56 = vmatprep.subr.mxu0 0.0
    %57 = vmatpush1.msra.mxu0 %v44
    %58 = vmatprep.subr.mxu0 0.0
    %59 = vmatpush1.msra.mxu0 0.0
    %60 = vmatprep.subr.mxu0 0.0
    %61 = vmatpush1.msra.mxu0 0.0
    %62 = vmatprep.subr.mxu0 0.0
    %63 = vmatpush1.msra.mxu0 0.0
    %64 = vmatprep.subr.mxu0 0.0
    %65 = vmatpush1.msra.mxu0 0.0
    %66 = vmatprep.subr.mxu0 0.0
    %67 = vmatpush1.msra.mxu0 0.0
    %68 = vmatprep.subr.mxu0 0.0
    %69 = vmatpush1.msra.mxu0 0.0
    %70 = vmatprep.subr.mxu0 0.0
    %71 = vmatpush1.msra.mxu0 0.0
    %72 = vmatprep.subr.mxu0 0.0
    %73 = vmatpush1.msra.mxu0 0.0
    %74 = vmatprep.subr.mxu0 0.0
    %75 = vmatpush1.msra.mxu0 0.0
    %76 = vmatprep.subr.mxu0 0.0
    %77 = vmatpush1.msra.mxu0 0.0
    %78 = vmatprep.subr.mxu0 0.0
    %79 = vmatpush1.msra.mxu0 0.0
    %80 = vmatprep.subr.mxu0 0.0
    %81 = vmatpush1.msra.mxu0 0.0
    %82 = vmatprep.subr.mxu0 0.0
    %83 = vmatpush1.msra.mxu0 0.0
    %84 = vmatprep.subr.mxu0 0.0
    %85 = vmatpush1.msra.mxu0 0.0
    %86 = vmatprep.subr.mxu0 0.0
    %87 = vmatpush1.msra.mxu0 0.0
    %88 = vmatprep.subr.mxu0 0.0
    %89 = vmatpush1.msra.mxu0 0.0
    %90 = vmatprep.subr.mxu0 0.0
    %91 = vmatpush1.msra.mxu0 0.0
    %92 = vmatprep.subr.mxu0 0.0
    %93 = vmatpush1.msra.mxu0 0.0
    %94 = vmatprep.subr.mxu0 0.0
    %95 = vmatpush1.msra.mxu0 0.0
    %96 = vmatprep.subr.mxu0 0.0
    %97 = vmatpush1.msra.mxu0 0.0
    %98 = vmatprep.subr.mxu0 0.0
    %99 = vmatpush1.msra.mxu0 0.0
    %100 = vmatprep.subr.mxu0 0.0
    %101 = vmatpush1.msra.mxu0 0.0
    %102 = vmatprep.subr.mxu0 0.0
    %103 = vmatpush1.msra.mxu0 0.0
    %104 = vmatprep.subr.mxu0 0.0
    %105 = vmatpush1.msra.mxu0 0.0
    %106 = vmatprep.subr.mxu0 0.0
    %107 = vmatpush1.msra.mxu0 0.0
    %108 = vmatprep.subr.mxu0 0.0
    %109 = vmatpush1.msra.mxu0 0.0
    %110 = vmatprep.subr.mxu0 0.0
    %111 = vmatpush1.msra.mxu0 0.0
    %112 = vmatprep.subr.mxu0 0.0
    %113 = vmatpush1.msra.mxu0 0.0
    %114 = vmatprep.subr.mxu0 0.0
    %115 = vmatpush1.msra.mxu0 0.0
    %116 = vmatprep.subr.mxu0 0.0
    %117 = vmatpush1.msra.mxu0 0.0
    %118 = vmatprep.mubr.f32.mxu0 0.0
    %119 = vmatmul.mubr.f32.gmra.mrb[0].mxu0 %v49
    %v120 = vpop.f32.mrb[0].mxu0
    %v121 = vadd.f32 0.0, %v120
    %v122 = vpop.f32.mrb[0].mxu0
    %123 = vmatprep.mubr.f32.mxu0 0.0
    %124 = vmatmul.mubr.f32.gmra.mrb[0].mxu0 %v52
    %v125 = vpop.f32.mrb[0].mxu0
    %v126 = vadd.f32 0.0, %v125
    %v127 = vpop.f32.mrb[0].mxu0
    %128 = vdwg.mxu0
    %s129 = scalar_lea.vmem %s3, 16
    %v130 = vld [vmem:[%s129] sm:$0xff]
    %v131 = vld [vmem:[%s129 + $0x8] sm:$0xff]
    %v133 = vsel %vm47, %v121, 0
    %v136 = vsel %vm47, %v126, 0
    %138 = vmatprep.subr.mxu0 0.0
    %139 = vmatpush1.msra.mxu0 %v130
    %140 = vmatprep.subr.mxu0 0.0
    %141 = vmatpush1.msra.mxu0 %v131
    %142 = vmatprep.subr.mxu0 0.0
    %143 = vmatpush1.msra.mxu0 0.0
    %144 = vmatprep.subr.mxu0 0.0
    %145 = vmatpush1.msra.mxu0 0.0
    %146 = vmatprep.subr.mxu0 0.0
    %147 = vmatpush1.msra.mxu0 0.0
    %148 = vmatprep.subr.mxu0 0.0
    %149 = vmatpush1.msra.mxu0 0.0
    %150 = vmatprep.subr.mxu0 0.0
    %151 = vmatpush1.msra.mxu0 0.0
    %152 = vmatprep.subr.mxu0 0.0
    %153 = vmatpush1.msra.mxu0 0.0
    %154 = vmatprep.subr.mxu0 0.0
    %155 = vmatpush1.msra.mxu0 0.0
    %156 = vmatprep.subr.mxu0 0.0
    %157 = vmatpush1.msra.mxu0 0.0
    %158 = vmatprep.subr.mxu0 0.0
    %159 = vmatpush1.msra.mxu0 0.0
    %160 = vmatprep.subr.mxu0 0.0
    %161 = vmatpush1.msra.mxu0 0.0
    %162 = vmatprep.subr.mxu0 0.0
    %163 = vmatpush1.msra.mxu0 0.0
    %164 = vmatprep.subr.mxu0 0.0
    %165 = vmatpush1.msra.mxu0 0.0
    %166 = vmatprep.subr.mxu0 0.0
    %167 = vmatpush1.msra.mxu0 0.0
    %168 = vmatprep.subr.mxu0 0.0
    %169 = vmatpush1.msra.mxu0 0.0
    %170 = vmatprep.subr.mxu0 0.0
    %171 = vmatpush1.msra.mxu0 0.0
    %172 = vmatprep.subr.mxu0 0.0
    %173 = vmatpush1.msra.mxu0 0.0
    %174 = vmatprep.subr.mxu0 0.0
    %175 = vmatpush1.msra.mxu0 0.0
    %176 = vmatprep.subr.mxu0 0.0
    %177 = vmatpush1.msra.mxu0 0.0
    %178 = vmatprep.subr.mxu0 0.0
    %179 = vmatpush1.msra.mxu0 0.0
    %180 = vmatprep.subr.mxu0 0.0
    %181 = vmatpush1.msra.mxu0 0.0
    %182 = vmatprep.subr.mxu0 0.0
    %183 = vmatpush1.msra.mxu0 0.0
    %184 = vmatprep.subr.mxu0 0.0
    %185 = vmatpush1.msra.mxu0 0.0
    %186 = vmatprep.subr.mxu0 0.0
    %187 = vmatpush1.msra.mxu0 0.0
    %188 = vmatprep.subr.mxu0 0.0
    %189 = vmatpush1.msra.mxu0 0.0
    %190 = vmatprep.subr.mxu0 0.0
    %191 = vmatpush1.msra.mxu0 0.0
    %192 = vmatprep.subr.mxu0 0.0
    %193 = vmatpush1.msra.mxu0 0.0
    %194 = vmatprep.subr.mxu0 0.0
    %195 = vmatpush1.msra.mxu0 0.0
    %196 = vmatprep.subr.mxu0 0.0
    %197 = vmatpush1.msra.mxu0 0.0
    %198 = vmatprep.subr.mxu0 0.0
    %199 = vmatpush1.msra.mxu0 0.0
    %200 = vmatprep.subr.mxu0 0.0
    %201 = vmatpush1.msra.mxu0 0.0
    %202 = vmatprep.mubr.f32.mxu0 0.0
    %203 = vmatmul.mubr.f32.gmra.mrb[0].mxu0 %v133
    %v204 = vpop.f32.mrb[0].mxu0
    %v205 = vadd.f32 0.0, %v204
    %v206 = vpop.f32.mrb[0].mxu0
    %207 = vmatprep.mubr.f32.mxu0 0.0
    %208 = vmatmul.mubr.f32.gmra.mrb[0].mxu0 %v136
    %v209 = vpop.f32.mrb[0].mxu0
    %v210 = vadd.f32 0.0, %v209
    %v211 = vpop.f32.mrb[0].mxu0
    %212 = vdwg.mxu0
    %v214 = vsel %vm47, %v43, 0
    %v217 = vsel %vm47, %v44, 0
    %219 = vmatprep.subr.mxu0 0.0
    %220 = vmatpush1.msra.mxu0 %v45
    %221 = vmatprep.subr.mxu0 0.0
    %222 = vmatpush1.msra.mxu0 %v46
    %223 = vmatprep.subr.mxu0 0.0
    %224 = vmatpush1.msra.mxu0 0.0
    %225 = vmatprep.subr.mxu0 0.0
    %226 = vmatpush1.msra.mxu0 0.0
    %227 = vmatprep.subr.mxu0 0.0
    %228 = vmatpush1.msra.mxu0 0.0
    %229 = vmatprep.subr.mxu0 0.0
    %230 = vmatpush1.msra.mxu0 0.0
    %231 = vmatprep.subr.mxu0 0.0
    %232 = vmatpush1.msra.mxu0 0.0
    %233 = vmatprep.subr.mxu0 0.0
    %234 = vmatpush1.msra.mxu0 0.0
    %235 = vmatprep.subr.mxu0 0.0
    %236 = vmatpush1.msra.mxu0 0.0
    %237 = vmatprep.subr.mxu0 0.0
    %238 = vmatpush1.msra.mxu0 0.0
    %239 = vmatprep.subr.mxu0 0.0
    %240 = vmatpush1.msra.mxu0 0.0
    %241 = vmatprep.subr.mxu0 0.0
    %242 = vmatpush1.msra.mxu0 0.0
    %243 = vmatprep.subr.mxu0 0.0
    %244 = vmatpush1.msra.mxu0 0.0
    %245 = vmatprep.subr.mxu0 0.0
    %246 = vmatpush1.msra.mxu0 0.0
    %247 = vmatprep.subr.mxu0 0.0
    %248 = vmatpush1.msra.mxu0 0.0
    %249 = vmatprep.subr.mxu0 0.0
    %250 = vmatpush1.msra.mxu0 0.0
    %251 = vmatprep.subr.mxu0 0.0
    %252 = vmatpush1.msra.mxu0 0.0
    %253 = vmatprep.subr.mxu0 0.0
    %254 = vmatpush1.msra.mxu0 0.0
    %255 = vmatprep.subr.mxu0 0.0
    %256 = vmatpush1.msra.mxu0 0.0
    %257 = vmatprep.subr.mxu0 0.0
    %258 = vmatpush1.msra.mxu0 0.0
    %259 = vmatprep.subr.mxu0 0.0
    %260 = vmatpush1.msra.mxu0 0.0
    %261 = vmatprep.subr.mxu0 0.0
    %262 = vmatpush1.msra.mxu0 0.0
    %263 = vmatprep.subr.mxu0 0.0
    %264 = vmatpush1.msra.mxu0 0.0
    %265 = vmatprep.subr.mxu0 0.0
    %266 = vmatpush1.msra.mxu0 0.0
    %267 = vmatprep.subr.mxu0 0.0
    %268 = vmatpush1.msra.mxu0 0.0
    %269 = vmatprep.subr.mxu0 0.0
    %270 = vmatpush1.msra.mxu0 0.0
    %271 = vmatprep.subr.mxu0 0.0
    %272 = vmatpush1.msra.mxu0 0.0
    %273 = vmatprep.subr.mxu0 0.0
    %274 = vmatpush1.msra.mxu0 0.0
    %275 = vmatprep.subr.mxu0 0.0
    %276 = vmatpush1.msra.mxu0 0.0
    %277 = vmatprep.subr.mxu0 0.0
    %278 = vmatpush1.msra.mxu0 0.0
    %279 = vmatprep.subr.mxu0 0.0
    %280 = vmatpush1.msra.mxu0 0.0
    %281 = vmatprep.subr.mxu0 0.0
    %282 = vmatpush1.msra.mxu0 0.0
    %283 = vmatprep.mubr.f32.mxu0 0.0
    %284 = vmatmul.mubr.f32.gmra.mrb[0].mxu0 %v214
    %v285 = vpop.f32.mrb[0].mxu0
    %v286 = vadd.f32 %v205, %v285
    %v287 = vpop.f32.mrb[0].mxu0
    %288 = vmatprep.mubr.f32.mxu0 0.0
    %289 = vmatmul.mubr.f32.gmra.mrb[0].mxu0 %v217
    %v290 = vpop.f32.mrb[0].mxu0
    %v291 = vadd.f32 %v210, %v290
    %v292 = vpop.f32.mrb[0].mxu0
    %293 = vdwg.mxu0
    %294 = vmatprep.subr.mxu0 0.0
    %295 = vmatpush1.msra.mxu0 %v121
    %296 = vmatprep.subr.mxu0 0.0
    %297 = vmatpush1.msra.mxu0 %v126
    %298 = vmatprep.subr.mxu0 0.0
    %299 = vmatpush1.msra.mxu0 0.0
    %300 = vmatprep.subr.mxu0 0.0
    %301 = vmatpush1.msra.mxu0 0.0
    %302 = vmatprep.subr.mxu0 0.0
    %303 = vmatpush1.msra.mxu0 0.0
    %304 = vmatprep.subr.mxu0 0.0
    %305 = vmatpush1.msra.mxu0 0.0
    %306 = vmatprep.subr.mxu0 0.0
    %307 = vmatpush1.msra.mxu0 0.0
    %308 = vmatprep.subr.mxu0 0.0
    %309 = vmatpush1.msra.mxu0 0.0
    %310 = vmatprep.subr.mxu0 0.0
    %311 = vmatpush1.msra.mxu0 0.0
    %312 = vmatprep.subr.mxu0 0.0
    %313 = vmatpush1.msra.mxu0 0.0
    %314 = vmatprep.subr.mxu0 0.0
    %315 = vmatpush1.msra.mxu0 0.0
    %316 = vmatprep.subr.mxu0 0.0
    %317 = vmatpush1.msra.mxu0 0.0
    %318 = vmatprep.subr.mxu0 0.0
    %319 = vmatpush1.msra.mxu0 0.0
    %320 = vmatprep.subr.mxu0 0.0
    %321 = vmatpush1.msra.mxu0 0.0
    %322 = vmatprep.subr.mxu0 0.0
    %323 = vmatpush1.msra.mxu0 0.0
    %324 = vmatprep.subr.mxu0 0.0
    %325 = vmatpush1.msra.mxu0 0.0
    %326 = vmatprep.subr.mxu0 0.0
    %327 = vmatpush1.msra.mxu0 0.0
    %328 = vmatprep.subr.mxu0 0.0
    %329 = vmatpush1.msra.mxu0 0.0
    %330 = vmatprep.subr.mxu0 0.0
    %331 = vmatpush1.msra.mxu0 0.0
    %332 = vmatprep.subr.mxu0 0.0
    %333 = vmatpush1.msra.mxu0 0.0
    %334 = vmatprep.subr.mxu0 0.0
    %335 = vmatpush1.msra.mxu0 0.0
    %336 = vmatprep.subr.mxu0 0.0
    %337 = vmatpush1.msra.mxu0 0.0
    %338 = vmatprep.subr.mxu0 0.0
    %339 = vmatpush1.msra.mxu0 0.0
    %340 = vmatprep.subr.mxu0 0.0
    %341 = vmatpush1.msra.mxu0 0.0
    %342 = vmatprep.subr.mxu0 0.0
    %343 = vmatpush1.msra.mxu0 0.0
    %344 = vmatprep.subr.mxu0 0.0
    %345 = vmatpush1.msra.mxu0 0.0
    %346 = vmatprep.subr.mxu0 0.0
    %347 = vmatpush1.msra.mxu0 0.0
    %348 = vmatprep.subr.mxu0 0.0
    %349 = vmatpush1.msra.mxu0 0.0
    %350 = vmatprep.subr.mxu0 0.0
    %351 = vmatpush1.msra.mxu0 0.0
    %352 = vmatprep.subr.mxu0 0.0
    %353 = vmatpush1.msra.mxu0 0.0
    %354 = vmatprep.subr.mxu0 0.0
    %355 = vmatpush1.msra.mxu0 0.0
    %356 = vmatprep.subr.mxu0 0.0
    %357 = vmatpush1.msra.mxu0 0.0
    %358 = vmatprep.mubr.f32.mxu0 0.0
    %359 = vmatmul.mubr.f32.gmra.mrb[0].mxu0 %v49
    %v360 = vpop.f32.mrb[0].mxu0
    %v361 = vadd.f32 0.0, %v360
    %v362 = vpop.f32.mrb[0].mxu0
    %363 = vmatprep.mubr.f32.mxu0 0.0
    %364 = vmatmul.mubr.f32.gmra.mrb[0].mxu0 %v52
    %v365 = vpop.f32.mrb[0].mxu0
    %v366 = vadd.f32 0.0, %v365
    %v367 = vpop.f32.mrb[0].mxu0
    %368 = vdwg.mxu0
    %v369 = vmul.f32 %v361, 2.0
    %v370 = vmul.f32 %v366, 2.0
    %v371 = vsub.f32 %v369, %v43
    %v372 = vsub.f32 %v370, %v44
    %s373 = scalar_lea.vmem %s3, 32
    %v374 = vld [vmem:[%s373] sm:$0xff]
    %v375 = vld [vmem:[%s373 + $0x8] sm:$0xff]
    %v377 = vsel %vm47, %v371, 0
    %v380 = vsel %vm47, %v372, 0
    %382 = vmatprep.subr.mxu0 0.0
    %383 = vmatpush1.msra.mxu0 %v374
    %384 = vmatprep.subr.mxu0 0.0
    %385 = vmatpush1.msra.mxu0 %v375
    %386 = vmatprep.subr.mxu0 0.0
    %387 = vmatpush1.msra.mxu0 0.0
    %388 = vmatprep.subr.mxu0 0.0
    %389 = vmatpush1.msra.mxu0 0.0
    %390 = vmatprep.subr.mxu0 0.0
    %391 = vmatpush1.msra.mxu0 0.0
    %392 = vmatprep.subr.mxu0 0.0
    %393 = vmatpush1.msra.mxu0 0.0
    %394 = vmatprep.subr.mxu0 0.0
    %395 = vmatpush1.msra.mxu0 0.0
    %396 = vmatprep.subr.mxu0 0.0
    %397 = vmatpush1.msra.mxu0 0.0
    %398 = vmatprep.subr.mxu0 0.0
    %399 = vmatpush1.msra.mxu0 0.0
    %400 = vmatprep.subr.mxu0 0.0
    %401 = vmatpush1.msra.mxu0 0.0
    %402 = vmatprep.subr.mxu0 0.0
    %403 = vmatpush1.msra.mxu0 0.0
    %404 = vmatprep.subr.mxu0 0.0
    %405 = vmatpush1.msra.mxu0 0.0
    %406 = vmatprep.subr.mxu0 0.0
    %407 = vmatpush1.msra.mxu0 0.0
    %408 = vmatprep.subr.mxu0 0.0
    %409 = vmatpush1.msra.mxu0 0.0
    %410 = vmatprep.subr.mxu0 0.0
    %411 = vmatpush1.msra.mxu0 0.0
    %412 = vmatprep.subr.mxu0 0.0
    %413 = vmatpush1.msra.mxu0 0.0
    %414 = vmatprep.subr.mxu0 0.0
    %415 = vmatpush1.msra.mxu0 0.0
    %416 = vmatprep.subr.mxu0 0.0
    %417 = vmatpush1.msra.mxu0 0.0
    %418 = vmatprep.subr.mxu0 0.0
    %419 = vmatpush1.msra.mxu0 0.0
    %420 = vmatprep.subr.mxu0 0.0
    %421 = vmatpush1.msra.mxu0 0.0
    %422 = vmatprep.subr.mxu0 0.0
    %423 = vmatpush1.msra.mxu0 0.0
    %424 = vmatprep.subr.mxu0 0.0
    %425 = vmatpush1.msra.mxu0 0.0
    %426 = vmatprep.subr.mxu0 0.0
    %427 = vmatpush1.msra.mxu0 0.0
    %428 = vmatprep.subr.mxu0 0.0
    %429 = vmatpush1.msra.mxu0 0.0
    %430 = vmatprep.subr.mxu0 0.0
    %431 = vmatpush1.msra.mxu0 0.0
    %432 = vmatprep.subr.mxu0 0.0
    %433 = vmatpush1.msra.mxu0 0.0
    %434 = vmatprep.subr.mxu0 0.0
    %435 = vmatpush1.msra.mxu0 0.0
    %436 = vmatprep.subr.mxu0 0.0
    %437 = vmatpush1.msra.mxu0 0.0
    %438 = vmatprep.subr.mxu0 0.0
    %439 = vmatpush1.msra.mxu0 0.0
    %440 = vmatprep.subr.mxu0 0.0
    %441 = vmatpush1.msra.mxu0 0.0
    %442 = vmatprep.subr.mxu0 0.0
    %443 = vmatpush1.msra.mxu0 0.0
    %444 = vmatprep.subr.mxu0 0.0
    %445 = vmatpush1.msra.mxu0 0.0
    %446 = vmatprep.mubr.f32.mxu0 0.0
    %447 = vmatmul.mubr.f32.gmra.mrb[0].mxu0 %v377
    %v448 = vpop.f32.mrb[0].mxu0
    %v449 = vadd.f32 0.0, %v448
    %v450 = vpop.f32.mrb[0].mxu0
    %451 = vmatprep.mubr.f32.mxu0 0.0
    %452 = vmatmul.mubr.f32.gmra.mrb[0].mxu0 %v380
    %v453 = vpop.f32.mrb[0].mxu0
    %v454 = vadd.f32 0.0, %v453
    %v455 = vpop.f32.mrb[0].mxu0
    %456 = vdwg.mxu0
    %v457 = vadd.f32 %v286, %v449
    %v458 = vadd.f32 %v291, %v454
    %v460 = vsel %vm47, %v41, 0
    %v463 = vsel %vm47, %v42, 0
    %465 = vmatprep.subr.mxu0 0.0
    %466 = vmatpush1.msra.mxu0 %v121
    %467 = vmatprep.subr.mxu0 0.0
    %468 = vmatpush1.msra.mxu0 %v126
    %469 = vmatprep.subr.mxu0 0.0
    %470 = vmatpush1.msra.mxu0 0.0
    %471 = vmatprep.subr.mxu0 0.0
    %472 = vmatpush1.msra.mxu0 0.0
    %473 = vmatprep.subr.mxu0 0.0
    %474 = vmatpush1.msra.mxu0 0.0
    %475 = vmatprep.subr.mxu0 0.0
    %476 = vmatpush1.msra.mxu0 0.0
    %477 = vmatprep.subr.mxu0 0.0
    %478 = vmatpush1.msra.mxu0 0.0
    %479 = vmatprep.subr.mxu0 0.0
    %480 = vmatpush1.msra.mxu0 0.0
    %481 = vmatprep.subr.mxu0 0.0
    %482 = vmatpush1.msra.mxu0 0.0
    %483 = vmatprep.subr.mxu0 0.0
    %484 = vmatpush1.msra.mxu0 0.0
    %485 = vmatprep.subr.mxu0 0.0
    %486 = vmatpush1.msra.mxu0 0.0
    %487 = vmatprep.subr.mxu0 0.0
    %488 = vmatpush1.msra.mxu0 0.0
    %489 = vmatprep.subr.mxu0 0.0
    %490 = vmatpush1.msra.mxu0 0.0
    %491 = vmatprep.subr.mxu0 0.0
    %492 = vmatpush1.msra.mxu0 0.0
    %493 = vmatprep.subr.mxu0 0.0
    %494 = vmatpush1.msra.mxu0 0.0
    %495 = vmatprep.subr.mxu0 0.0
    %496 = vmatpush1.msra.mxu0 0.0
    %497 = vmatprep.subr.mxu0 0.0
    %498 = vmatpush1.msra.mxu0 0.0
    %499 = vmatprep.subr.mxu0 0.0
    %500 = vmatpush1.msra.mxu0 0.0
    %501 = vmatprep.subr.mxu0 0.0
    %502 = vmatpush1.msra.mxu0 0.0
    %503 = vmatprep.subr.mxu0 0.0
    %504 = vmatpush1.msra.mxu0 0.0
    %505 = vmatprep.subr.mxu0 0.0
    %506 = vmatpush1.msra.mxu0 0.0
    %507 = vmatprep.subr.mxu0 0.0
    %508 = vmatpush1.msra.mxu0 0.0
    %509 = vmatprep.subr.mxu0 0.0
    %510 = vmatpush1.msra.mxu0 0.0
    %511 = vmatprep.subr.mxu0 0.0
    %512 = vmatpush1.msra.mxu0 0.0
    %513 = vmatprep.subr.mxu0 0.0
    %514 = vmatpush1.msra.mxu0 0.0
    %515 = vmatprep.subr.mxu0 0.0
    %516 = vmatpush1.msra.mxu0 0.0
    %517 = vmatprep.subr.mxu0 0.0
    %518 = vmatpush1.msra.mxu0 0.0
    %519 = vmatprep.subr.mxu0 0.0
    %520 = vmatpush1.msra.mxu0 0.0
    %521 = vmatprep.subr.mxu0 0.0
    %522 = vmatpush1.msra.mxu0 0.0
    %523 = vmatprep.subr.mxu0 0.0
    %524 = vmatpush1.msra.mxu0 0.0
    %525 = vmatprep.subr.mxu0 0.0
    %526 = vmatpush1.msra.mxu0 0.0
    %527 = vmatprep.subr.mxu0 0.0
    %528 = vmatpush1.msra.mxu0 0.0
    %529 = vmatprep.mubr.f32.mxu0 0.0
    %530 = vmatmul.mubr.f32.gmra.mrb[0].mxu0 %v460
    %v531 = vpop.f32.mrb[0].mxu0
    %v532 = vadd.f32 0.0, %v531
    %v533 = vpop.f32.mrb[0].mxu0
    %534 = vmatprep.mubr.f32.mxu0 0.0
    %535 = vmatmul.mubr.f32.gmra.mrb[0].mxu0 %v463
    %v536 = vpop.f32.mrb[0].mxu0
    %v537 = vadd.f32 0.0, %v536
    %v538 = vpop.f32.mrb[0].mxu0
    %539 = vdwg.mxu0
    %s540 = scalar_lea.vmem %s3, 48
    %v541 = vld [vmem:[%s540] sm:$0xff]
    %v542 = vld [vmem:[%s540 + $0x8] sm:$0xff]
    %v544 = vsel %vm47, %v532, 0
    %v547 = vsel %vm47, %v537, 0
    %549 = vmatprep.subr.mxu0 0.0
    %550 = vmatpush1.msra.mxu0 %v541
    %551 = vmatprep.subr.mxu0 0.0
    %552 = vmatpush1.msra.mxu0 %v542
    %553 = vmatprep.subr.mxu0 0.0
    %554 = vmatpush1.msra.mxu0 0.0
    %555 = vmatprep.subr.mxu0 0.0
    %556 = vmatpush1.msra.mxu0 0.0
    %557 = vmatprep.subr.mxu0 0.0
    %558 = vmatpush1.msra.mxu0 0.0
    %559 = vmatprep.subr.mxu0 0.0
    %560 = vmatpush1.msra.mxu0 0.0
    %561 = vmatprep.subr.mxu0 0.0
    %562 = vmatpush1.msra.mxu0 0.0
    %563 = vmatprep.subr.mxu0 0.0
    %564 = vmatpush1.msra.mxu0 0.0
    %565 = vmatprep.subr.mxu0 0.0
    %566 = vmatpush1.msra.mxu0 0.0
    %567 = vmatprep.subr.mxu0 0.0
    %568 = vmatpush1.msra.mxu0 0.0
    %569 = vmatprep.subr.mxu0 0.0
    %570 = vmatpush1.msra.mxu0 0.0
    %571 = vmatprep.subr.mxu0 0.0
    %572 = vmatpush1.msra.mxu0 0.0
    %573 = vmatprep.subr.mxu0 0.0
    %574 = vmatpush1.msra.mxu0 0.0
    %575 = vmatprep.subr.mxu0 0.0
    %576 = vmatpush1.msra.mxu0 0.0
    %577 = vmatprep.subr.mxu0 0.0
    %578 = vmatpush1.msra.mxu0 0.0
    %579 = vmatprep.subr.mxu0 0.0
    %580 = vmatpush1.msra.mxu0 0.0
    %581 = vmatprep.subr.mxu0 0.0
    %582 = vmatpush1.msra.mxu0 0.0
    %583 = vmatprep.subr.mxu0 0.0
    %584 = vmatpush1.msra.mxu0 0.0
    %585 = vmatprep.subr.mxu0 0.0
    %586 = vmatpush1.msra.mxu0 0.0
    %587 = vmatprep.subr.mxu0 0.0
    %588 = vmatpush1.msra.mxu0 0.0
    %589 = vmatprep.subr.mxu0 0.0
    %590 = vmatpush1.msra.mxu0 0.0
    %591 = vmatprep.subr.mxu0 0.0
    %592 = vmatpush1.msra.mxu0 0.0
    %593 = vmatprep.subr.mxu0 0.0
    %594 = vmatpush1.msra.mxu0 0.0
    %595 = vmatprep.subr.mxu0 0.0
    %596 = vmatpush1.msra.mxu0 0.0
    %597 = vmatprep.subr.mxu0 0.0
    %598 = vmatpush1.msra.mxu0 0.0
    %599 = vmatprep.subr.mxu0 0.0
    %600 = vmatpush1.msra.mxu0 0.0
    %601 = vmatprep.subr.mxu0 0.0
    %602 = vmatpush1.msra.mxu0 0.0
    %603 = vmatprep.subr.mxu0 0.0
    %604 = vmatpush1.msra.mxu0 0.0
    %605 = vmatprep.subr.mxu0 0.0
    %606 = vmatpush1.msra.mxu0 0.0
    %607 = vmatprep.subr.mxu0 0.0
    %608 = vmatpush1.msra.mxu0 0.0
    %609 = vmatprep.subr.mxu0 0.0
    %610 = vmatpush1.msra.mxu0 0.0
    %611 = vmatprep.subr.mxu0 0.0
    %612 = vmatpush1.msra.mxu0 0.0
    %613 = vmatprep.mubr.f32.mxu0 0.0
    %614 = vmatmul.mubr.f32.gmra.mrb[0].mxu0 %v544
    %v615 = vpop.f32.mrb[0].mxu0
    %v616 = vadd.f32 0.0, %v615
    %v617 = vpop.f32.mrb[0].mxu0
    %618 = vmatprep.mubr.f32.mxu0 0.0
    %619 = vmatmul.mubr.f32.gmra.mrb[0].mxu0 %v547
    %v620 = vpop.f32.mrb[0].mxu0
    %v621 = vadd.f32 0.0, %v620
    %v622 = vpop.f32.mrb[0].mxu0
    %623 = vdwg.mxu0
    %v624 = vadd.f32 %v457, %v616
    %v625 = vadd.f32 %v458, %v621
    %626 = vmatprep.subr.mxu0 0.0
    %627 = vmatpush1.msra.mxu0 %v532
    %628 = vmatprep.subr.mxu0 0.0
    %629 = vmatpush1.msra.mxu0 %v537
    %630 = vmatprep.subr.mxu0 0.0
    %631 = vmatpush1.msra.mxu0 0.0
    %632 = vmatprep.subr.mxu0 0.0
    %633 = vmatpush1.msra.mxu0 0.0
    %634 = vmatprep.subr.mxu0 0.0
    %635 = vmatpush1.msra.mxu0 0.0
    %636 = vmatprep.subr.mxu0 0.0
    %637 = vmatpush1.msra.mxu0 0.0
    %638 = vmatprep.subr.mxu0 0.0
    %639 = vmatpush1.msra.mxu0 0.0
    %640 = vmatprep.subr.mxu0 0.0
    %641 = vmatpush1.msra.mxu0 0.0
    %642 = vmatprep.subr.mxu0 0.0
    %643 = vmatpush1.msra.mxu0 0.0
    %644 = vmatprep.subr.mxu0 0.0
    %645 = vmatpush1.msra.mxu0 0.0
    %646 = vmatprep.subr.mxu0 0.0
    %647 = vmatpush1.msra.mxu0 0.0
    %648 = vmatprep.subr.mxu0 0.0
    %649 = vmatpush1.msra.mxu0 0.0
    %650 = vmatprep.subr.mxu0 0.0
    %651 = vmatpush1.msra.mxu0 0.0
    %652 = vmatprep.subr.mxu0 0.0
    %653 = vmatpush1.msra.mxu0 0.0
    %654 = vmatprep.subr.mxu0 0.0
    %655 = vmatpush1.msra.mxu0 0.0
    %656 = vmatprep.subr.mxu0 0.0
    %657 = vmatpush1.msra.mxu0 0.0
    %658 = vmatprep.subr.mxu0 0.0
    %659 = vmatpush1.msra.mxu0 0.0
    %660 = vmatprep.subr.mxu0 0.0
    %661 = vmatpush1.msra.mxu0 0.0
    %662 = vmatprep.subr.mxu0 0.0
    %663 = vmatpush1.msra.mxu0 0.0
    %664 = vmatprep.subr.mxu0 0.0
    %665 = vmatpush1.msra.mxu0 0.0
    %666 = vmatprep.subr.mxu0 0.0
    %667 = vmatpush1.msra.mxu0 0.0
    %668 = vmatprep.subr.mxu0 0.0
    %669 = vmatpush1.msra.mxu0 0.0
    %670 = vmatprep.subr.mxu0 0.0
    %671 = vmatpush1.msra.mxu0 0.0
    %672 = vmatprep.subr.mxu0 0.0
    %673 = vmatpush1.msra.mxu0 0.0
    %674 = vmatprep.subr.mxu0 0.0
    %675 = vmatpush1.msra.mxu0 0.0
    %676 = vmatprep.subr.mxu0 0.0
    %677 = vmatpush1.msra.mxu0 0.0
    %678 = vmatprep.subr.mxu0 0.0
    %679 = vmatpush1.msra.mxu0 0.0
    %680 = vmatprep.subr.mxu0 0.0
    %681 = vmatpush1.msra.mxu0 0.0
    %682 = vmatprep.subr.mxu0 0.0
    %683 = vmatpush1.msra.mxu0 0.0
    %684 = vmatprep.subr.mxu0 0.0
    %685 = vmatpush1.msra.mxu0 0.0
    %686 = vmatprep.subr.mxu0 0.0
    %687 = vmatpush1.msra.mxu0 0.0
    %688 = vmatprep.subr.mxu0 0.0
    %689 = vmatpush1.msra.mxu0 0.0
    %690 = vmatprep.mubr.f32.mxu0 0.0
    %691 = vmatmul.mubr.f32.gmra.mrb[0].mxu0 %v460
    %v692 = vpop.f32.mrb[0].mxu0
    %v693 = vadd.f32 0.0, %v692
    %v694 = vpop.f32.mrb[0].mxu0
    %695 = vmatprep.mubr.f32.mxu0 0.0
    %696 = vmatmul.mubr.f32.gmra.mrb[0].mxu0 %v463
    %v697 = vpop.f32.mrb[0].mxu0
    %v698 = vadd.f32 0.0, %v697
    %v699 = vpop.f32.mrb[0].mxu0
    %700 = vdwg.mxu0
    %v701 = vmul.f32 %v693, 2.0
    %v702 = vmul.f32 %v698, 2.0
    %v703 = vsub.f32 %v701, %v121
    %v704 = vsub.f32 %v702, %v126
    %s705 = scalar_lea.vmem %s3, 64
    %v706 = vld [vmem:[%s705] sm:$0xff]
    %v707 = vld [vmem:[%s705 + $0x8] sm:$0xff]
    %v709 = vsel %vm47, %v703, 0
    %v712 = vsel %vm47, %v704, 0
    %714 = vmatprep.subr.mxu0 0.0
    %715 = vmatpush1.msra.mxu0 %v706
    %716 = vmatprep.subr.mxu0 0.0
    %717 = vmatpush1.msra.mxu0 %v707
    %718 = vmatprep.subr.mxu0 0.0
    %719 = vmatpush1.msra.mxu0 0.0
    %720 = vmatprep.subr.mxu0 0.0
    %721 = vmatpush1.msra.mxu0 0.0
    %722 = vmatprep.subr.mxu0 0.0
    %723 = vmatpush1.msra.mxu0 0.0
    %724 = vmatprep.subr.mxu0 0.0
    %725 = vmatpush1.msra.mxu0 0.0
    %726 = vmatprep.subr.mxu0 0.0
    %727 = vmatpush1.msra.mxu0 0.0
    %728 = vmatprep.subr.mxu0 0.0
    %729 = vmatpush1.msra.mxu0 0.0
    %730 = vmatprep.subr.mxu0 0.0
    %731 = vmatpush1.msra.mxu0 0.0
    %732 = vmatprep.subr.mxu0 0.0
    %733 = vmatpush1.msra.mxu0 0.0
    %734 = vmatprep.subr.mxu0 0.0
    %735 = vmatpush1.msra.mxu0 0.0
    %736 = vmatprep.subr.mxu0 0.0
    %737 = vmatpush1.msra.mxu0 0.0
    %738 = vmatprep.subr.mxu0 0.0
    %739 = vmatpush1.msra.mxu0 0.0
    %740 = vmatprep.subr.mxu0 0.0
    %741 = vmatpush1.msra.mxu0 0.0
    %742 = vmatprep.subr.mxu0 0.0
    %743 = vmatpush1.msra.mxu0 0.0
    %744 = vmatprep.subr.mxu0 0.0
    %745 = vmatpush1.msra.mxu0 0.0
    %746 = vmatprep.subr.mxu0 0.0
    %747 = vmatpush1.msra.mxu0 0.0
    %748 = vmatprep.subr.mxu0 0.0
    %749 = vmatpush1.msra.mxu0 0.0
    %750 = vmatprep.subr.mxu0 0.0
    %751 = vmatpush1.msra.mxu0 0.0
    %752 = vmatprep.subr.mxu0 0.0
    %753 = vmatpush1.msra.mxu0 0.0
    %754 = vmatprep.subr.mxu0 0.0
    %755 = vmatpush1.msra.mxu0 0.0
    %756 = vmatprep.subr.mxu0 0.0
    %757 = vmatpush1.msra.mxu0 0.0
    %758 = vmatprep.subr.mxu0 0.0
    %759 = vmatpush1.msra.mxu0 0.0
    %760 = vmatprep.subr.mxu0 0.0
    %761 = vmatpush1.msra.mxu0 0.0
    %762 = vmatprep.subr.mxu0 0.0
    %763 = vmatpush1.msra.mxu0 0.0
    %764 = vmatprep.subr.mxu0 0.0
    %765 = vmatpush1.msra.mxu0 0.0
    %766 = vmatprep.subr.mxu0 0.0
    %767 = vmatpush1.msra.mxu0 0.0
    %768 = vmatprep.subr.mxu0 0.0
    %769 = vmatpush1.msra.mxu0 0.0
    %770 = vmatprep.subr.mxu0 0.0
    %771 = vmatpush1.msra.mxu0 0.0
    %772 = vmatprep.subr.mxu0 0.0
    %773 = vmatpush1.msra.mxu0 0.0
    %774 = vmatprep.subr.mxu0 0.0
    %775 = vmatpush1.msra.mxu0 0.0
    %776 = vmatprep.subr.mxu0 0.0
    %777 = vmatpush1.msra.mxu0 0.0
    %778 = vmatprep.mubr.f32.mxu0 0.0
    %779 = vmatmul.mubr.f32.gmra.mrb[0].mxu0 %v709
    %v780 = vpop.f32.mrb[0].mxu0
    %v781 = vadd.f32 0.0, %v780
    %v782 = vpop.f32.mrb[0].mxu0
    %783 = vmatprep.mubr.f32.mxu0 0.0
    %784 = vmatmul.mubr.f32.gmra.mrb[0].mxu0 %v712
    %v785 = vpop.f32.mrb[0].mxu0
    %v786 = vadd.f32 0.0, %v785
    %v787 = vpop.f32.mrb[0].mxu0
    %788 = vdwg.mxu0
    %v789 = vadd.f32 %v624, %v781
    %v790 = vadd.f32 %v625, %v786
    %v791 = vld [vmem:[%s4] sm:$0x1]
    %v793 = vlaneseq
    %v794 = vshrl.u32 %v793, 7
    %v795 = vsub.s32 0, %v794
    %v796 = vrot.slane %v791, %v795
    %v798 = vadd.f32 %v789, %v796
    %v799 = vadd.f32 %v790, %v796
    %v800 = vmax.f32 %v798, 0.0
    %v801 = vmax.f32 %v799, 0.0
    %v802 = vld [vmem:[%s5] sm:$0xff]
    %v803 = vld [vmem:[%s5 + $0x8] sm:$0xff]
    %v804 = vld [vmem:[%s5 + $0x10] sm:$0xff]
    %v805 = vld [vmem:[%s5 + $0x18] sm:$0xff]
    %v806 = vld [vmem:[%s5 + $0x20] sm:$0xff]
    %v807 = vld [vmem:[%s5 + $0x28] sm:$0xff]
    %v808 = vld [vmem:[%s5 + $0x30] sm:$0xff]
    %v809 = vld [vmem:[%s5 + $0x38] sm:$0xff]
    %810 = vmatprep.subr.mxu0 0.0
    %811 = vmatpush1.msra.mxu0 %v800
    %812 = vmatprep.subr.mxu0 0.0
    %813 = vmatpush1.msra.mxu0 %v801
    %814 = vmatprep.subr.mxu0 0.0
    %815 = vmatpush1.msra.mxu0 0.0
    %816 = vmatprep.subr.mxu0 0.0
    %817 = vmatpush1.msra.mxu0 0.0
    %818 = vmatprep.subr.mxu0 0.0
    %819 = vmatpush1.msra.mxu0 0.0
    %820 = vmatprep.subr.mxu0 0.0
    %821 = vmatpush1.msra.mxu0 0.0
    %822 = vmatprep.subr.mxu0 0.0
    %823 = vmatpush1.msra.mxu0 0.0
    %824 = vmatprep.subr.mxu0 0.0
    %825 = vmatpush1.msra.mxu0 0.0
    %826 = vmatprep.subr.mxu0 0.0
    %827 = vmatpush1.msra.mxu0 0.0
    %828 = vmatprep.subr.mxu0 0.0
    %829 = vmatpush1.msra.mxu0 0.0
    %830 = vmatprep.subr.mxu0 0.0
    %831 = vmatpush1.msra.mxu0 0.0
    %832 = vmatprep.subr.mxu0 0.0
    %833 = vmatpush1.msra.mxu0 0.0
    %834 = vmatprep.subr.mxu0 0.0
    %835 = vmatpush1.msra.mxu0 0.0
    %836 = vmatprep.subr.mxu0 0.0
    %837 = vmatpush1.msra.mxu0 0.0
    %838 = vmatprep.subr.mxu0 0.0
    %839 = vmatpush1.msra.mxu0 0.0
    %840 = vmatprep.subr.mxu0 0.0
    %841 = vmatpush1.msra.mxu0 0.0
    %842 = vmatprep.subr.mxu0 0.0
    %843 = vmatpush1.msra.mxu0 0.0
    %844 = vmatprep.subr.mxu0 0.0
    %845 = vmatpush1.msra.mxu0 0.0
    %846 = vmatprep.subr.mxu0 0.0
    %847 = vmatpush1.msra.mxu0 0.0
    %848 = vmatprep.subr.mxu0 0.0
    %849 = vmatpush1.msra.mxu0 0.0
    %850 = vmatprep.subr.mxu0 0.0
    %851 = vmatpush1.msra.mxu0 0.0
    %852 = vmatprep.subr.mxu0 0.0
    %853 = vmatpush1.msra.mxu0 0.0
    %854 = vmatprep.subr.mxu0 0.0
    %855 = vmatpush1.msra.mxu0 0.0
    %856 = vmatprep.subr.mxu0 0.0
    %857 = vmatpush1.msra.mxu0 0.0
    %858 = vmatprep.subr.mxu0 0.0
    %859 = vmatpush1.msra.mxu0 0.0
    %860 = vmatprep.subr.mxu0 0.0
    %861 = vmatpush1.msra.mxu0 0.0
    %862 = vmatprep.subr.mxu0 0.0
    %863 = vmatpush1.msra.mxu0 0.0
    %864 = vmatprep.subr.mxu0 0.0
    %865 = vmatpush1.msra.mxu0 0.0
    %866 = vmatprep.subr.mxu0 0.0
    %867 = vmatpush1.msra.mxu0 0.0
    %868 = vmatprep.subr.mxu0 0.0
    %869 = vmatpush1.msra.mxu0 0.0
    %870 = vmatprep.subr.mxu0 0.0
    %871 = vmatpush1.msra.mxu0 0.0
    %872 = vmatprep.subr.mxu0 0.0
    %873 = vmatpush1.msra.mxu0 0.0
    %874 = vmatprep.mubr.f32.mxu0 0.0
    %875 = vmatmul.mubr.f32.gmra.mrb[0].mxu0 %v49
    %v876 = vpop.f32.mrb[0].mxu0
    %v877 = vadd.f32 0.0, %v876
    %v878 = vpop.f32.mrb[0].mxu0
    %879 = vmatprep.mubr.f32.mxu0 0.0
    %880 = vmatmul.mubr.f32.gmra.mrb[0].mxu0 %v52
    %v881 = vpop.f32.mrb[0].mxu0
    %v882 = vadd.f32 0.0, %v881
    %v883 = vpop.f32.mrb[0].mxu0
    %884 = vdwg.mxu0
    %s885 = scalar_lea.vmem %s5, 64
    %v886 = vld [vmem:[%s885] sm:$0xff]
    %v887 = vld [vmem:[%s885 + $0x8] sm:$0xff]
    %v888 = vld [vmem:[%s885 + $0x10] sm:$0xff]
    %v889 = vld [vmem:[%s885 + $0x18] sm:$0xff]
    %v890 = vld [vmem:[%s885 + $0x20] sm:$0xff]
    %v891 = vld [vmem:[%s885 + $0x28] sm:$0xff]
    %v892 = vld [vmem:[%s885 + $0x30] sm:$0xff]
    %v893 = vld [vmem:[%s885 + $0x38] sm:$0xff]
    %vm894 = vcmask 523264
    %v896 = vsel %vm894, %v877, 0
    %v899 = vsel %vm894, %v882, 0
    %901 = vmatprep.subr.mxu0 0.0
    %902 = vmatpush1.msra.mxu0 %v886
    %903 = vmatprep.subr.mxu0 0.0
    %904 = vmatpush1.msra.mxu0 %v887
    %905 = vmatprep.subr.mxu0 0.0
    %906 = vmatpush1.msra.mxu0 %v888
    %907 = vmatprep.subr.mxu0 0.0
    %908 = vmatpush1.msra.mxu0 %v889
    %909 = vmatprep.subr.mxu0 0.0
    %910 = vmatpush1.msra.mxu0 %v890
    %911 = vmatprep.subr.mxu0 0.0
    %912 = vmatpush1.msra.mxu0 %v891
    %913 = vmatprep.subr.mxu0 0.0
    %914 = vmatpush1.msra.mxu0 %v892
    %915 = vmatprep.subr.mxu0 0.0
    %916 = vmatpush1.msra.mxu0 %v893
    %917 = vmatprep.subr.mxu0 0.0
    %918 = vmatpush1.msra.mxu0 0.0
    %919 = vmatprep.subr.mxu0 0.0
    %920 = vmatpush1.msra.mxu0 0.0
    %921 = vmatprep.subr.mxu0 0.0
    %922 = vmatpush1.msra.mxu0 0.0
    %923 = vmatprep.subr.mxu0 0.0
    %924 = vmatpush1.msra.mxu0 0.0
    %925 = vmatprep.subr.mxu0 0.0
    %926 = vmatpush1.msra.mxu0 0.0
    %927 = vmatprep.subr.mxu0 0.0
    %928 = vmatpush1.msra.mxu0 0.0
    %929 = vmatprep.subr.mxu0 0.0
    %930 = vmatpush1.msra.mxu0 0.0
    %931 = vmatprep.subr.mxu0 0.0
    %932 = vmatpush1.msra.mxu0 0.0
    %933 = vmatprep.subr.mxu0 0.0
    %934 = vmatpush1.msra.mxu0 0.0
    %935 = vmatprep.subr.mxu0 0.0
    %936 = vmatpush1.msra.mxu0 0.0
    %937 = vmatprep.subr.mxu0 0.0
    %938 = vmatpush1.msra.mxu0 0.0
    %939 = vmatprep.subr.mxu0 0.0
    %940 = vmatpush1.msra.mxu0 0.0
    %941 = vmatprep.subr.mxu0 0.0
    %942 = vmatpush1.msra.mxu0 0.0
    %943 = vmatprep.subr.mxu0 0.0
    %944 = vmatpush1.msra.mxu0 0.0
    %945 = vmatprep.subr.mxu0 0.0
    %946 = vmatpush1.msra.mxu0 0.0
    %947 = vmatprep.subr.mxu0 0.0
    %948 = vmatpush1.msra.mxu0 0.0
    %949 = vmatprep.subr.mxu0 0.0
    %950 = vmatpush1.msra.mxu0 0.0
    %951 = vmatprep.subr.mxu0 0.0
    %952 = vmatpush1.msra.mxu0 0.0
    %953 = vmatprep.subr.mxu0 0.0
    %954 = vmatpush1.msra.mxu0 0.0
    %955 = vmatprep.subr.mxu0 0.0
    %956 = vmatpush1.msra.mxu0 0.0
    %957 = vmatprep.subr.mxu0 0.0
    %958 = vmatpush1.msra.mxu0 0.0
    %959 = vmatprep.subr.mxu0 0.0
    %960 = vmatpush1.msra.mxu0 0.0
    %961 = vmatprep.subr.mxu0 0.0
    %962 = vmatpush1.msra.mxu0 0.0
    %963 = vmatprep.subr.mxu0 0.0
    %964 = vmatpush1.msra.mxu0 0.0
    %965 = vmatprep.mubr.f32.mxu0 0.0
    %966 = vmatmul.mubr.f32.gmra.mrb[0].mxu0 %v896
    %v967 = vpop.f32.mrb[0].mxu0
    %v968 = vadd.f32 0.0, %v967
    %v969 = vpop.f32.mrb[0].mxu0
    %970 = vmatprep.mubr.f32.mxu0 0.0
    %971 = vmatmul.mubr.f32.gmra.mrb[0].mxu0 %v899
    %v972 = vpop.f32.mrb[0].mxu0
    %v973 = vadd.f32 0.0, %v972
    %v974 = vpop.f32.mrb[0].mxu0
    %975 = vdwg.mxu0
    %v977 = vsel %vm894, %v800, 0
    %v980 = vsel %vm894, %v801, 0
    %982 = vmatprep.subr.mxu0 0.0
    %983 = vmatpush1.msra.mxu0 %v802
    %984 = vmatprep.subr.mxu0 0.0
    %985 = vmatpush1.msra.mxu0 %v803
    %986 = vmatprep.subr.mxu0 0.0
    %987 = vmatpush1.msra.mxu0 %v804
    %988 = vmatprep.subr.mxu0 0.0
    %989 = vmatpush1.msra.mxu0 %v805
    %990 = vmatprep.subr.mxu0 0.0
    %991 = vmatpush1.msra.mxu0 %v806
    %992 = vmatprep.subr.mxu0 0.0
    %993 = vmatpush1.msra.mxu0 %v807
    %994 = vmatprep.subr.mxu0 0.0
    %995 = vmatpush1.msra.mxu0 %v808
    %996 = vmatprep.subr.mxu0 0.0
    %997 = vmatpush1.msra.mxu0 %v809
    %998 = vmatprep.subr.mxu0 0.0
    %999 = vmatpush1.msra.mxu0 0.0
    %1000 = vmatprep.subr.mxu0 0.0
    %1001 = vmatpush1.msra.mxu0 0.0
    %1002 = vmatprep.subr.mxu0 0.0
    %1003 = vmatpush1.msra.mxu0 0.0
    %1004 = vmatprep.subr.mxu0 0.0
    %1005 = vmatpush1.msra.mxu0 0.0
    %1006 = vmatprep.subr.mxu0 0.0
    %1007 = vmatpush1.msra.mxu0 0.0
    %1008 = vmatprep.subr.mxu0 0.0
    %1009 = vmatpush1.msra.mxu0 0.0
    %1010 = vmatprep.subr.mxu0 0.0
    %1011 = vmatpush1.msra.mxu0 0.0
    %1012 = vmatprep.subr.mxu0 0.0
    %1013 = vmatpush1.msra.mxu0 0.0
    %1014 = vmatprep.subr.mxu0 0.0
    %1015 = vmatpush1.msra.mxu0 0.0
    %1016 = vmatprep.subr.mxu0 0.0
    %1017 = vmatpush1.msra.mxu0 0.0
    %1018 = vmatprep.subr.mxu0 0.0
    %1019 = vmatpush1.msra.mxu0 0.0
    %1020 = vmatprep.subr.mxu0 0.0
    %1021 = vmatpush1.msra.mxu0 0.0
    %1022 = vmatprep.subr.mxu0 0.0
    %1023 = vmatpush1.msra.mxu0 0.0
    %1024 = vmatprep.subr.mxu0 0.0
    %1025 = vmatpush1.msra.mxu0 0.0
    %1026 = vmatprep.subr.mxu0 0.0
    %1027 = vmatpush1.msra.mxu0 0.0
    %1028 = vmatprep.subr.mxu0 0.0
    %1029 = vmatpush1.msra.mxu0 0.0
    %1030 = vmatprep.subr.mxu0 0.0
    %1031 = vmatpush1.msra.mxu0 0.0
    %1032 = vmatprep.subr.mxu0 0.0
    %1033 = vmatpush1.msra.mxu0 0.0
    %1034 = vmatprep.subr.mxu0 0.0
    %1035 = vmatpush1.msra.mxu0 0.0
    %1036 = vmatprep.subr.mxu0 0.0
    %1037 = vmatpush1.msra.mxu0 0.0
    %1038 = vmatprep.subr.mxu0 0.0
    %1039 = vmatpush1.msra.mxu0 0.0
    %1040 = vmatprep.subr.mxu0 0.0
    %1041 = vmatpush1.msra.mxu0 0.0
    %1042 = vmatprep.subr.mxu0 0.0
    %1043 = vmatpush1.msra.mxu0 0.0
    %1044 = vmatprep.subr.mxu0 0.0
    %1045 = vmatpush1.msra.mxu0 0.0
    %1046 = vmatprep.mubr.f32.mxu0 0.0
    %1047 = vmatmul.mubr.f32.gmra.mrb[0].mxu0 %v977
    %v1048 = vpop.f32.mrb[0].mxu0
    %v1049 = vadd.f32 %v968, %v1048
    %v1050 = vpop.f32.mrb[0].mxu0
    %1051 = vmatprep.mubr.f32.mxu0 0.0
    %1052 = vmatmul.mubr.f32.gmra.mrb[0].mxu0 %v980
    %v1053 = vpop.f32.mrb[0].mxu0
    %v1054 = vadd.f32 %v973, %v1053
    %v1055 = vpop.f32.mrb[0].mxu0
    %1056 = vdwg.mxu0
    %1057 = vmatprep.subr.mxu0 0.0
    %1058 = vmatpush1.msra.mxu0 %v877
    %1059 = vmatprep.subr.mxu0 0.0
    %1060 = vmatpush1.msra.mxu0 %v882
    %1061 = vmatprep.subr.mxu0 0.0
    %1062 = vmatpush1.msra.mxu0 0.0
    %1063 = vmatprep.subr.mxu0 0.0
    %1064 = vmatpush1.msra.mxu0 0.0
    %1065 = vmatprep.subr.mxu0 0.0
    %1066 = vmatpush1.msra.mxu0 0.0
    %1067 = vmatprep.subr.mxu0 0.0
    %1068 = vmatpush1.msra.mxu0 0.0
    %1069 = vmatprep.subr.mxu0 0.0
    %1070 = vmatpush1.msra.mxu0 0.0
    %1071 = vmatprep.subr.mxu0 0.0
    %1072 = vmatpush1.msra.mxu0 0.0
    %1073 = vmatprep.subr.mxu0 0.0
    %1074 = vmatpush1.msra.mxu0 0.0
    %1075 = vmatprep.subr.mxu0 0.0
    %1076 = vmatpush1.msra.mxu0 0.0
    %1077 = vmatprep.subr.mxu0 0.0
    %1078 = vmatpush1.msra.mxu0 0.0
    %1079 = vmatprep.subr.mxu0 0.0
    %1080 = vmatpush1.msra.mxu0 0.0
    %1081 = vmatprep.subr.mxu0 0.0
    %1082 = vmatpush1.msra.mxu0 0.0
    %1083 = vmatprep.subr.mxu0 0.0
    %1084 = vmatpush1.msra.mxu0 0.0
    %1085 = vmatprep.subr.mxu0 0.0
    %1086 = vmatpush1.msra.mxu0 0.0
    %1087 = vmatprep.subr.mxu0 0.0
    %1088 = vmatpush1.msra.mxu0 0.0
    %1089 = vmatprep.subr.mxu0 0.0
    %1090 = vmatpush1.msra.mxu0 0.0
    %1091 = vmatprep.subr.mxu0 0.0
    %1092 = vmatpush1.msra.mxu0 0.0
    %1093 = vmatprep.subr.mxu0 0.0
    %1094 = vmatpush1.msra.mxu0 0.0
    %1095 = vmatprep.subr.mxu0 0.0
    %1096 = vmatpush1.msra.mxu0 0.0
    %1097 = vmatprep.subr.mxu0 0.0
    %1098 = vmatpush1.msra.mxu0 0.0
    %1099 = vmatprep.subr.mxu0 0.0
    %1100 = vmatpush1.msra.mxu0 0.0
    %1101 = vmatprep.subr.mxu0 0.0
    %1102 = vmatpush1.msra.mxu0 0.0
    %1103 = vmatprep.subr.mxu0 0.0
    %1104 = vmatpush1.msra.mxu0 0.0
    %1105 = vmatprep.subr.mxu0 0.0
    %1106 = vmatpush1.msra.mxu0 0.0
    %1107 = vmatprep.subr.mxu0 0.0
    %1108 = vmatpush1.msra.mxu0 0.0
    %1109 = vmatprep.subr.mxu0 0.0
    %1110 = vmatpush1.msra.mxu0 0.0
    %1111 = vmatprep.subr.mxu0 0.0
    %1112 = vmatpush1.msra.mxu0 0.0
    %1113 = vmatprep.subr.mxu0 0.0
    %1114 = vmatpush1.msra.mxu0 0.0
    %1115 = vmatprep.subr.mxu0 0.0
    %1116 = vmatpush1.msra.mxu0 0.0
    %1117 = vmatprep.subr.mxu0 0.0
    %1118 = vmatpush1.msra.mxu0 0.0
    %1119 = vmatprep.subr.mxu0 0.0
    %1120 = vmatpush1.msra.mxu0 0.0
    %1121 = vmatprep.mubr.f32.mxu0 0.0
    %1122 = vmatmul.mubr.f32.gmra.mrb[0].mxu0 %v49
    %v1123 = vpop.f32.mrb[0].mxu0
    %v1124 = vadd.f32 0.0, %v1123
    %v1125 = vpop.f32.mrb[0].mxu0
    %1126 = vmatprep.mubr.f32.mxu0 0.0
    %1127 = vmatmul.mubr.f32.gmra.mrb[0].mxu0 %v52
    %v1128 = vpop.f32.mrb[0].mxu0
    %v1129 = vadd.f32 0.0, %v1128
    %v1130 = vpop.f32.mrb[0].mxu0
    %1131 = vdwg.mxu0
    %v1132 = vmul.f32 %v1124, 2.0
    %v1133 = vmul.f32 %v1129, 2.0
    %v1134 = vsub.f32 %v1132, %v800
    %v1135 = vsub.f32 %v1133, %v801
    %s1136 = scalar_lea.vmem %s5, 128
    %v1137 = vld [vmem:[%s1136] sm:$0xff]
    %v1138 = vld [vmem:[%s1136 + $0x8] sm:$0xff]
    %v1139 = vld [vmem:[%s1136 + $0x10] sm:$0xff]
    %v1140 = vld [vmem:[%s1136 + $0x18] sm:$0xff]
    %v1141 = vld [vmem:[%s1136 + $0x20] sm:$0xff]
    %v1142 = vld [vmem:[%s1136 + $0x28] sm:$0xff]
    %v1143 = vld [vmem:[%s1136 + $0x30] sm:$0xff]
    %v1144 = vld [vmem:[%s1136 + $0x38] sm:$0xff]
    %v1146 = vsel %vm894, %v1134, 0
    %v1149 = vsel %vm894, %v1135, 0
    %1151 = vmatprep.subr.mxu0 0.0
    %1152 = vmatpush1.msra.mxu0 %v1137
    %1153 = vmatprep.subr.mxu0 0.0
    %1154 = vmatpush1.msra.mxu0 %v1138
    %1155 = vmatprep.subr.mxu0 0.0
    %1156 = vmatpush1.msra.mxu0 %v1139
    %1157 = vmatprep.subr.mxu0 0.0
    %1158 = vmatpush1.msra.mxu0 %v1140
    %1159 = vmatprep.subr.mxu0 0.0
    %1160 = vmatpush1.msra.mxu0 %v1141
    %1161 = vmatprep.subr.mxu0 0.0
    %1162 = vmatpush1.msra.mxu0 %v1142
    %1163 = vmatprep.subr.mxu0 0.0
    %1164 = vmatpush1.msra.mxu0 %v1143
    %1165 = vmatprep.subr.mxu0 0.0
    %1166 = vmatpush1.msra.mxu0 %v1144
    %1167 = vmatprep.subr.mxu0 0.0
    %1168 = vmatpush1.msra.mxu0 0.0
    %1169 = vmatprep.subr.mxu0 0.0
    %1170 = vmatpush1.msra.mxu0 0.0
    %1171 = vmatprep.subr.mxu0 0.0
    %1172 = vmatpush1.msra.mxu0 0.0
    %1173 = vmatprep.subr.mxu0 0.0
    %1174 = vmatpush1.msra.mxu0 0.0
    %1175 = vmatprep.subr.mxu0 0.0
    %1176 = vmatpush1.msra.mxu0 0.0
    %1177 = vmatprep.subr.mxu0 0.0
    %1178 = vmatpush1.msra.mxu0 0.0
    %1179 = vmatprep.subr.mxu0 0.0
    %1180 = vmatpush1.msra.mxu0 0.0
    %1181 = vmatprep.subr.mxu0 0.0
    %1182 = vmatpush1.msra.mxu0 0.0
    %1183 = vmatprep.subr.mxu0 0.0
    %1184 = vmatpush1.msra.mxu0 0.0
    %1185 = vmatprep.subr.mxu0 0.0
    %1186 = vmatpush1.msra.mxu0 0.0
    %1187 = vmatprep.subr.mxu0 0.0
    %1188 = vmatpush1.msra.mxu0 0.0
    %1189 = vmatprep.subr.mxu0 0.0
    %1190 = vmatpush1.msra.mxu0 0.0
    %1191 = vmatprep.subr.mxu0 0.0
    %1192 = vmatpush1.msra.mxu0 0.0
    %1193 = vmatprep.subr.mxu0 0.0
    %1194 = vmatpush1.msra.mxu0 0.0
    %1195 = vmatprep.subr.mxu0 0.0
    %1196 = vmatpush1.msra.mxu0 0.0
    %1197 = vmatprep.subr.mxu0 0.0
    %1198 = vmatpush1.msra.mxu0 0.0
    %1199 = vmatprep.subr.mxu0 0.0
    %1200 = vmatpush1.msra.mxu0 0.0
    %1201 = vmatprep.subr.mxu0 0.0
    %1202 = vmatpush1.msra.mxu0 0.0
    %1203 = vmatprep.subr.mxu0 0.0
    %1204 = vmatpush1.msra.mxu0 0.0
    %1205 = vmatprep.subr.mxu0 0.0
    %1206 = vmatpush1.msra.mxu0 0.0
    %1207 = vmatprep.subr.mxu0 0.0
    %1208 = vmatpush1.msra.mxu0 0.0
    %1209 = vmatprep.subr.mxu0 0.0
    %1210 = vmatpush1.msra.mxu0 0.0
    %1211 = vmatprep.subr.mxu0 0.0
    %1212 = vmatpush1.msra.mxu0 0.0
    %1213 = vmatprep.subr.mxu0 0.0
    %1214 = vmatpush1.msra.mxu0 0.0
    %1215 = vmatprep.mubr.f32.mxu0 0.0
    %1216 = vmatmul.mubr.f32.gmra.mrb[0].mxu0 %v1146
    %v1217 = vpop.f32.mrb[0].mxu0
    %v1218 = vadd.f32 0.0, %v1217
    %v1219 = vpop.f32.mrb[0].mxu0
    %1220 = vmatprep.mubr.f32.mxu0 0.0
    %1221 = vmatmul.mubr.f32.gmra.mrb[0].mxu0 %v1149
    %v1222 = vpop.f32.mrb[0].mxu0
    %v1223 = vadd.f32 0.0, %v1222
    %v1224 = vpop.f32.mrb[0].mxu0
    %1225 = vdwg.mxu0
    %v1226 = vadd.f32 %v1049, %v1218
    %v1227 = vadd.f32 %v1054, %v1223
    %1228 = vmatprep.subr.mxu0 0.0
    %1229 = vmatpush1.msra.mxu0 %v877
    %1230 = vmatprep.subr.mxu0 0.0
    %1231 = vmatpush1.msra.mxu0 %v882
    %1232 = vmatprep.subr.mxu0 0.0
    %1233 = vmatpush1.msra.mxu0 0.0
    %1234 = vmatprep.subr.mxu0 0.0
    %1235 = vmatpush1.msra.mxu0 0.0
    %1236 = vmatprep.subr.mxu0 0.0
    %1237 = vmatpush1.msra.mxu0 0.0
    %1238 = vmatprep.subr.mxu0 0.0
    %1239 = vmatpush1.msra.mxu0 0.0
    %1240 = vmatprep.subr.mxu0 0.0
    %1241 = vmatpush1.msra.mxu0 0.0
    %1242 = vmatprep.subr.mxu0 0.0
    %1243 = vmatpush1.msra.mxu0 0.0
    %1244 = vmatprep.subr.mxu0 0.0
    %1245 = vmatpush1.msra.mxu0 0.0
    %1246 = vmatprep.subr.mxu0 0.0
    %1247 = vmatpush1.msra.mxu0 0.0
    %1248 = vmatprep.subr.mxu0 0.0
    %1249 = vmatpush1.msra.mxu0 0.0
    %1250 = vmatprep.subr.mxu0 0.0
    %1251 = vmatpush1.msra.mxu0 0.0
    %1252 = vmatprep.subr.mxu0 0.0
    %1253 = vmatpush1.msra.mxu0 0.0
    %1254 = vmatprep.subr.mxu0 0.0
    %1255 = vmatpush1.msra.mxu0 0.0
    %1256 = vmatprep.subr.mxu0 0.0
    %1257 = vmatpush1.msra.mxu0 0.0
    %1258 = vmatprep.subr.mxu0 0.0
    %1259 = vmatpush1.msra.mxu0 0.0
    %1260 = vmatprep.subr.mxu0 0.0
    %1261 = vmatpush1.msra.mxu0 0.0
    %1262 = vmatprep.subr.mxu0 0.0
    %1263 = vmatpush1.msra.mxu0 0.0
    %1264 = vmatprep.subr.mxu0 0.0
    %1265 = vmatpush1.msra.mxu0 0.0
    %1266 = vmatprep.subr.mxu0 0.0
    %1267 = vmatpush1.msra.mxu0 0.0
    %1268 = vmatprep.subr.mxu0 0.0
    %1269 = vmatpush1.msra.mxu0 0.0
    %1270 = vmatprep.subr.mxu0 0.0
    %1271 = vmatpush1.msra.mxu0 0.0
    %1272 = vmatprep.subr.mxu0 0.0
    %1273 = vmatpush1.msra.mxu0 0.0
    %1274 = vmatprep.subr.mxu0 0.0
    %1275 = vmatpush1.msra.mxu0 0.0
    %1276 = vmatprep.subr.mxu0 0.0
    %1277 = vmatpush1.msra.mxu0 0.0
    %1278 = vmatprep.subr.mxu0 0.0
    %1279 = vmatpush1.msra.mxu0 0.0
    %1280 = vmatprep.subr.mxu0 0.0
    %1281 = vmatpush1.msra.mxu0 0.0
    %1282 = vmatprep.subr.mxu0 0.0
    %1283 = vmatpush1.msra.mxu0 0.0
    %1284 = vmatprep.subr.mxu0 0.0
    %1285 = vmatpush1.msra.mxu0 0.0
    %1286 = vmatprep.subr.mxu0 0.0
    %1287 = vmatpush1.msra.mxu0 0.0
    %1288 = vmatprep.subr.mxu0 0.0
    %1289 = vmatpush1.msra.mxu0 0.0
    %1290 = vmatprep.subr.mxu0 0.0
    %1291 = vmatpush1.msra.mxu0 0.0
    %1292 = vmatprep.mubr.f32.mxu0 0.0
    %1293 = vmatmul.mubr.f32.gmra.mrb[0].mxu0 %v460
    %v1294 = vpop.f32.mrb[0].mxu0
    %v1295 = vadd.f32 0.0, %v1294
    %v1296 = vpop.f32.mrb[0].mxu0
    %1297 = vmatprep.mubr.f32.mxu0 0.0
    %1298 = vmatmul.mubr.f32.gmra.mrb[0].mxu0 %v463
    %v1299 = vpop.f32.mrb[0].mxu0
    %v1300 = vadd.f32 0.0, %v1299
    %v1301 = vpop.f32.mrb[0].mxu0
    %1302 = vdwg.mxu0
    %s1303 = scalar_lea.vmem %s5, 192
    %v1304 = vld [vmem:[%s1303] sm:$0xff]
    %v1305 = vld [vmem:[%s1303 + $0x8] sm:$0xff]
    %v1306 = vld [vmem:[%s1303 + $0x10] sm:$0xff]
    %v1307 = vld [vmem:[%s1303 + $0x18] sm:$0xff]
    %v1308 = vld [vmem:[%s1303 + $0x20] sm:$0xff]
    %v1309 = vld [vmem:[%s1303 + $0x28] sm:$0xff]
    %v1310 = vld [vmem:[%s1303 + $0x30] sm:$0xff]
    %v1311 = vld [vmem:[%s1303 + $0x38] sm:$0xff]
    %v1313 = vsel %vm894, %v1295, 0
    %v1316 = vsel %vm894, %v1300, 0
    %1318 = vmatprep.subr.mxu0 0.0
    %1319 = vmatpush1.msra.mxu0 %v1304
    %1320 = vmatprep.subr.mxu0 0.0
    %1321 = vmatpush1.msra.mxu0 %v1305
    %1322 = vmatprep.subr.mxu0 0.0
    %1323 = vmatpush1.msra.mxu0 %v1306
    %1324 = vmatprep.subr.mxu0 0.0
    %1325 = vmatpush1.msra.mxu0 %v1307
    %1326 = vmatprep.subr.mxu0 0.0
    %1327 = vmatpush1.msra.mxu0 %v1308
    %1328 = vmatprep.subr.mxu0 0.0
    %1329 = vmatpush1.msra.mxu0 %v1309
    %1330 = vmatprep.subr.mxu0 0.0
    %1331 = vmatpush1.msra.mxu0 %v1310
    %1332 = vmatprep.subr.mxu0 0.0
    %1333 = vmatpush1.msra.mxu0 %v1311
    %1334 = vmatprep.subr.mxu0 0.0
    %1335 = vmatpush1.msra.mxu0 0.0
    %1336 = vmatprep.subr.mxu0 0.0
    %1337 = vmatpush1.msra.mxu0 0.0
    %1338 = vmatprep.subr.mxu0 0.0
    %1339 = vmatpush1.msra.mxu0 0.0
    %1340 = vmatprep.subr.mxu0 0.0
    %1341 = vmatpush1.msra.mxu0 0.0
    %1342 = vmatprep.subr.mxu0 0.0
    %1343 = vmatpush1.msra.mxu0 0.0
    %1344 = vmatprep.subr.mxu0 0.0
    %1345 = vmatpush1.msra.mxu0 0.0
    %1346 = vmatprep.subr.mxu0 0.0
    %1347 = vmatpush1.msra.mxu0 0.0
    %1348 = vmatprep.subr.mxu0 0.0
    %1349 = vmatpush1.msra.mxu0 0.0
    %1350 = vmatprep.subr.mxu0 0.0
    %1351 = vmatpush1.msra.mxu0 0.0
    %1352 = vmatprep.subr.mxu0 0.0
    %1353 = vmatpush1.msra.mxu0 0.0
    %1354 = vmatprep.subr.mxu0 0.0
    %1355 = vmatpush1.msra.mxu0 0.0
    %1356 = vmatprep.subr.mxu0 0.0
    %1357 = vmatpush1.msra.mxu0 0.0
    %1358 = vmatprep.subr.mxu0 0.0
    %1359 = vmatpush1.msra.mxu0 0.0
    %1360 = vmatprep.subr.mxu0 0.0
    %1361 = vmatpush1.msra.mxu0 0.0
    %1362 = vmatprep.subr.mxu0 0.0
    %1363 = vmatpush1.msra.mxu0 0.0
    %1364 = vmatprep.subr.mxu0 0.0
    %1365 = vmatpush1.msra.mxu0 0.0
    %1366 = vmatprep.subr.mxu0 0.0
    %1367 = vmatpush1.msra.mxu0 0.0
    %1368 = vmatprep.subr.mxu0 0.0
    %1369 = vmatpush1.msra.mxu0 0.0
    %1370 = vmatprep.subr.mxu0 0.0
    %1371 = vmatpush1.msra.mxu0 0.0
    %1372 = vmatprep.subr.mxu0 0.0
    %1373 = vmatpush1.msra.mxu0 0.0
    %1374 = vmatprep.subr.mxu0 0.0
    %1375 = vmatpush1.msra.mxu0 0.0
    %1376 = vmatprep.subr.mxu0 0.0
    %1377 = vmatpush1.msra.mxu0 0.0
    %1378 = vmatprep.subr.mxu0 0.0
    %1379 = vmatpush1.msra.mxu0 0.0
    %1380 = vmatprep.subr.mxu0 0.0
    %1381 = vmatpush1.msra.mxu0 0.0
    %1382 = vmatprep.mubr.f32.mxu0 0.0
    %1383 = vmatmul.mubr.f32.gmra.mrb[0].mxu0 %v1313
    %v1384 = vpop.f32.mrb[0].mxu0
    %v1385 = vadd.f32 0.0, %v1384
    %v1386 = vpop.f32.mrb[0].mxu0
    %1387 = vmatprep.mubr.f32.mxu0 0.0
    %1388 = vmatmul.mubr.f32.gmra.mrb[0].mxu0 %v1316
    %v1389 = vpop.f32.mrb[0].mxu0
    %v1390 = vadd.f32 0.0, %v1389
    %v1391 = vpop.f32.mrb[0].mxu0
    %1392 = vdwg.mxu0
    %v1393 = vadd.f32 %v1226, %v1385
    %v1394 = vadd.f32 %v1227, %v1390
    %1395 = vmatprep.subr.mxu0 0.0
    %1396 = vmatpush1.msra.mxu0 %v1295
    %1397 = vmatprep.subr.mxu0 0.0
    %1398 = vmatpush1.msra.mxu0 %v1300
    %1399 = vmatprep.subr.mxu0 0.0
    %1400 = vmatpush1.msra.mxu0 0.0
    %1401 = vmatprep.subr.mxu0 0.0
    %1402 = vmatpush1.msra.mxu0 0.0
    %1403 = vmatprep.subr.mxu0 0.0
    %1404 = vmatpush1.msra.mxu0 0.0
    %1405 = vmatprep.subr.mxu0 0.0
    %1406 = vmatpush1.msra.mxu0 0.0
    %1407 = vmatprep.subr.mxu0 0.0
    %1408 = vmatpush1.msra.mxu0 0.0
    %1409 = vmatprep.subr.mxu0 0.0
    %1410 = vmatpush1.msra.mxu0 0.0
    %1411 = vmatprep.subr.mxu0 0.0
    %1412 = vmatpush1.msra.mxu0 0.0
    %1413 = vmatprep.subr.mxu0 0.0
    %1414 = vmatpush1.msra.mxu0 0.0
    %1415 = vmatprep.subr.mxu0 0.0
    %1416 = vmatpush1.msra.mxu0 0.0
    %1417 = vmatprep.subr.mxu0 0.0
    %1418 = vmatpush1.msra.mxu0 0.0
    %1419 = vmatprep.subr.mxu0 0.0
    %1420 = vmatpush1.msra.mxu0 0.0
    %1421 = vmatprep.subr.mxu0 0.0
    %1422 = vmatpush1.msra.mxu0 0.0
    %1423 = vmatprep.subr.mxu0 0.0
    %1424 = vmatpush1.msra.mxu0 0.0
    %1425 = vmatprep.subr.mxu0 0.0
    %1426 = vmatpush1.msra.mxu0 0.0
    %1427 = vmatprep.subr.mxu0 0.0
    %1428 = vmatpush1.msra.mxu0 0.0
    %1429 = vmatprep.subr.mxu0 0.0
    %1430 = vmatpush1.msra.mxu0 0.0
    %1431 = vmatprep.subr.mxu0 0.0
    %1432 = vmatpush1.msra.mxu0 0.0
    %1433 = vmatprep.subr.mxu0 0.0
    %1434 = vmatpush1.msra.mxu0 0.0
    %1435 = vmatprep.subr.mxu0 0.0
    %1436 = vmatpush1.msra.mxu0 0.0
    %1437 = vmatprep.subr.mxu0 0.0
    %1438 = vmatpush1.msra.mxu0 0.0
    %1439 = vmatprep.subr.mxu0 0.0
    %1440 = vmatpush1.msra.mxu0 0.0
    %1441 = vmatprep.subr.mxu0 0.0
    %1442 = vmatpush1.msra.mxu0 0.0
    %1443 = vmatprep.subr.mxu0 0.0
    %1444 = vmatpush1.msra.mxu0 0.0
    %1445 = vmatprep.subr.mxu0 0.0
    %1446 = vmatpush1.msra.mxu0 0.0
    %1447 = vmatprep.subr.mxu0 0.0
    %1448 = vmatpush1.msra.mxu0 0.0
    %1449 = vmatprep.subr.mxu0 0.0
    %1450 = vmatpush1.msra.mxu0 0.0
    %1451 = vmatprep.subr.mxu0 0.0
    %1452 = vmatpush1.msra.mxu0 0.0
    %1453 = vmatprep.subr.mxu0 0.0
    %1454 = vmatpush1.msra.mxu0 0.0
    %1455 = vmatprep.subr.mxu0 0.0
    %1456 = vmatpush1.msra.mxu0 0.0
    %1457 = vmatprep.subr.mxu0 0.0
    %1458 = vmatpush1.msra.mxu0 0.0
    %1459 = vmatprep.mubr.f32.mxu0 0.0
    %1460 = vmatmul.mubr.f32.gmra.mrb[0].mxu0 %v460
    %v1461 = vpop.f32.mrb[0].mxu0
    %v1462 = vadd.f32 0.0, %v1461
    %v1463 = vpop.f32.mrb[0].mxu0
    %1464 = vmatprep.mubr.f32.mxu0 0.0
    %1465 = vmatmul.mubr.f32.gmra.mrb[0].mxu0 %v463
    %v1466 = vpop.f32.mrb[0].mxu0
    %v1467 = vadd.f32 0.0, %v1466
    %v1468 = vpop.f32.mrb[0].mxu0
    %1469 = vdwg.mxu0
    %v1470 = vmul.f32 %v1462, 2.0
    %v1471 = vmul.f32 %v1467, 2.0
    %v1472 = vsub.f32 %v1470, %v877
    %v1473 = vsub.f32 %v1471, %v882
    %s1474 = scalar_lea.vmem %s5, 256
    %v1475 = vld [vmem:[%s1474] sm:$0xff]
    %v1476 = vld [vmem:[%s1474 + $0x8] sm:$0xff]
    %v1477 = vld [vmem:[%s1474 + $0x10] sm:$0xff]
    %v1478 = vld [vmem:[%s1474 + $0x18] sm:$0xff]
    %v1479 = vld [vmem:[%s1474 + $0x20] sm:$0xff]
    %v1480 = vld [vmem:[%s1474 + $0x28] sm:$0xff]
    %v1481 = vld [vmem:[%s1474 + $0x30] sm:$0xff]
    %v1482 = vld [vmem:[%s1474 + $0x38] sm:$0xff]
    %v1484 = vsel %vm894, %v1472, 0
    %v1487 = vsel %vm894, %v1473, 0
    %1489 = vmatprep.subr.mxu0 0.0
    %1490 = vmatpush1.msra.mxu0 %v1475
    %1491 = vmatprep.subr.mxu0 0.0
    %1492 = vmatpush1.msra.mxu0 %v1476
    %1493 = vmatprep.subr.mxu0 0.0
    %1494 = vmatpush1.msra.mxu0 %v1477
    %1495 = vmatprep.subr.mxu0 0.0
    %1496 = vmatpush1.msra.mxu0 %v1478
    %1497 = vmatprep.subr.mxu0 0.0
    %1498 = vmatpush1.msra.mxu0 %v1479
    %1499 = vmatprep.subr.mxu0 0.0
    %1500 = vmatpush1.msra.mxu0 %v1480
    %1501 = vmatprep.subr.mxu0 0.0
    %1502 = vmatpush1.msra.mxu0 %v1481
    %1503 = vmatprep.subr.mxu0 0.0
    %1504 = vmatpush1.msra.mxu0 %v1482
    %1505 = vmatprep.subr.mxu0 0.0
    %1506 = vmatpush1.msra.mxu0 0.0
    %1507 = vmatprep.subr.mxu0 0.0
    %1508 = vmatpush1.msra.mxu0 0.0
    %1509 = vmatprep.subr.mxu0 0.0
    %1510 = vmatpush1.msra.mxu0 0.0
    %1511 = vmatprep.subr.mxu0 0.0
    %1512 = vmatpush1.msra.mxu0 0.0
    %1513 = vmatprep.subr.mxu0 0.0
    %1514 = vmatpush1.msra.mxu0 0.0
    %1515 = vmatprep.subr.mxu0 0.0
    %1516 = vmatpush1.msra.mxu0 0.0
    %1517 = vmatprep.subr.mxu0 0.0
    %1518 = vmatpush1.msra.mxu0 0.0
    %1519 = vmatprep.subr.mxu0 0.0
    %1520 = vmatpush1.msra.mxu0 0.0
    %1521 = vmatprep.subr.mxu0 0.0
    %1522 = vmatpush1.msra.mxu0 0.0
    %1523 = vmatprep.subr.mxu0 0.0
    %1524 = vmatpush1.msra.mxu0 0.0
    %1525 = vmatprep.subr.mxu0 0.0
    %1526 = vmatpush1.msra.mxu0 0.0
    %1527 = vmatprep.subr.mxu0 0.0
    %1528 = vmatpush1.msra.mxu0 0.0
    %1529 = vmatprep.subr.mxu0 0.0
    %1530 = vmatpush1.msra.mxu0 0.0
    %1531 = vmatprep.subr.mxu0 0.0
    %1532 = vmatpush1.msra.mxu0 0.0
    %1533 = vmatprep.subr.mxu0 0.0
    %1534 = vmatpush1.msra.mxu0 0.0
    %1535 = vmatprep.subr.mxu0 0.0
    %1536 = vmatpush1.msra.mxu0 0.0
    %1537 = vmatprep.subr.mxu0 0.0
    %1538 = vmatpush1.msra.mxu0 0.0
    %1539 = vmatprep.subr.mxu0 0.0
    %1540 = vmatpush1.msra.mxu0 0.0
    %1541 = vmatprep.subr.mxu0 0.0
    %1542 = vmatpush1.msra.mxu0 0.0
    %1543 = vmatprep.subr.mxu0 0.0
    %1544 = vmatpush1.msra.mxu0 0.0
    %1545 = vmatprep.subr.mxu0 0.0
    %1546 = vmatpush1.msra.mxu0 0.0
    %1547 = vmatprep.subr.mxu0 0.0
    %1548 = vmatpush1.msra.mxu0 0.0
    %1549 = vmatprep.subr.mxu0 0.0
    %1550 = vmatpush1.msra.mxu0 0.0
    %1551 = vmatprep.subr.mxu0 0.0
    %1552 = vmatpush1.msra.mxu0 0.0
    %1553 = vmatprep.mubr.f32.mxu0 0.0
    %1554 = vmatmul.mubr.f32.gmra.mrb[0].mxu0 %v1484
    %v1555 = vpop.f32.mrb[0].mxu0
    %v1556 = vadd.f32 0.0, %v1555
    %v1557 = vpop.f32.mrb[0].mxu0
    %1558 = vmatprep.mubr.f32.mxu0 0.0
    %1559 = vmatmul.mubr.f32.gmra.mrb[0].mxu0 %v1487
    %v1560 = vpop.f32.mrb[0].mxu0
    %v1561 = vadd.f32 0.0, %v1560
    %v1562 = vpop.f32.mrb[0].mxu0
    %1563 = vdwg.mxu0
    %v1564 = vadd.f32 %v1393, %v1556
    %v1565 = vadd.f32 %v1394, %v1561
    %v1566 = vld [vmem:[%s6] sm:$0x1]
    %v1568 = vlaneseq
    %v1569 = vshrl.u32 %v1568, 7
    %v1570 = vsub.s32 0, %v1569
    %v1571 = vrot.slane %v1566, %v1570
    %v1573 = vadd.f32 %v1564, %v1571
    %v1574 = vadd.f32 %v1565, %v1571
    %v1575 = vmax.f32 %v1573, 0.0
    %v1576 = vmax.f32 %v1574, 0.0
    %v1577 = vld [vmem:[%s7] sm:$0xff]
    %v1578 = vld [vmem:[%s7 + $0x8] sm:$0xff]
    %v1579 = vld [vmem:[%s7 + $0x10] sm:$0xff]
    %v1580 = vld [vmem:[%s7 + $0x18] sm:$0xff]
    %1581 = vmatprep.subr.mxu0 0.0
    %1582 = vmatpush1.msra.mxu0 %v1575
    %1583 = vmatprep.subr.mxu0 0.0
    %1584 = vmatpush1.msra.mxu0 %v1576
    %1585 = vmatprep.subr.mxu0 0.0
    %1586 = vmatpush1.msra.mxu0 0.0
    %1587 = vmatprep.subr.mxu0 0.0
    %1588 = vmatpush1.msra.mxu0 0.0
    %1589 = vmatprep.subr.mxu0 0.0
    %1590 = vmatpush1.msra.mxu0 0.0
    %1591 = vmatprep.subr.mxu0 0.0
    %1592 = vmatpush1.msra.mxu0 0.0
    %1593 = vmatprep.subr.mxu0 0.0
    %1594 = vmatpush1.msra.mxu0 0.0
    %1595 = vmatprep.subr.mxu0 0.0
    %1596 = vmatpush1.msra.mxu0 0.0
    %1597 = vmatprep.subr.mxu0 0.0
    %1598 = vmatpush1.msra.mxu0 0.0
    %1599 = vmatprep.subr.mxu0 0.0
    %1600 = vmatpush1.msra.mxu0 0.0
    %1601 = vmatprep.subr.mxu0 0.0
    %1602 = vmatpush1.msra.mxu0 0.0
    %1603 = vmatprep.subr.mxu0 0.0
    %1604 = vmatpush1.msra.mxu0 0.0
    %1605 = vmatprep.subr.mxu0 0.0
    %1606 = vmatpush1.msra.mxu0 0.0
    %1607 = vmatprep.subr.mxu0 0.0
    %1608 = vmatpush1.msra.mxu0 0.0
    %1609 = vmatprep.subr.mxu0 0.0
    %1610 = vmatpush1.msra.mxu0 0.0
    %1611 = vmatprep.subr.mxu0 0.0
    %1612 = vmatpush1.msra.mxu0 0.0
    %1613 = vmatprep.subr.mxu0 0.0
    %1614 = vmatpush1.msra.mxu0 0.0
    %1615 = vmatprep.subr.mxu0 0.0
    %1616 = vmatpush1.msra.mxu0 0.0
    %1617 = vmatprep.subr.mxu0 0.0
    %1618 = vmatpush1.msra.mxu0 0.0
    %1619 = vmatprep.subr.mxu0 0.0
    %1620 = vmatpush1.msra.mxu0 0.0
    %1621 = vmatprep.subr.mxu0 0.0
    %1622 = vmatpush1.msra.mxu0 0.0
    %1623 = vmatprep.subr.mxu0 0.0
    %1624 = vmatpush1.msra.mxu0 0.0
    %1625 = vmatprep.subr.mxu0 0.0
    %1626 = vmatpush1.msra.mxu0 0.0
    %1627 = vmatprep.subr.mxu0 0.0
    %1628 = vmatpush1.msra.mxu0 0.0
    %1629 = vmatprep.subr.mxu0 0.0
    %1630 = vmatpush1.msra.mxu0 0.0
    %1631 = vmatprep.subr.mxu0 0.0
    %1632 = vmatpush1.msra.mxu0 0.0
    %1633 = vmatprep.subr.mxu0 0.0
    %1634 = vmatpush1.msra.mxu0 0.0
    %1635 = vmatprep.subr.mxu0 0.0
    %1636 = vmatpush1.msra.mxu0 0.0
    %1637 = vmatprep.subr.mxu0 0.0
    %1638 = vmatpush1.msra.mxu0 0.0
    %1639 = vmatprep.subr.mxu0 0.0
    %1640 = vmatpush1.msra.mxu0 0.0
    %1641 = vmatprep.subr.mxu0 0.0
    %1642 = vmatpush1.msra.mxu0 0.0
    %1643 = vmatprep.subr.mxu0 0.0
    %1644 = vmatpush1.msra.mxu0 0.0
    %1645 = vmatprep.mubr.f32.mxu0 0.0
    %1646 = vmatmul.mubr.f32.gmra.mrb[0].mxu0 %v49
    %v1647 = vpop.f32.mrb[0].mxu0
    %v1648 = vadd.f32 0.0, %v1647
    %v1649 = vpop.f32.mrb[0].mxu0
    %1650 = vmatprep.mubr.f32.mxu0 0.0
    %1651 = vmatmul.mubr.f32.gmra.mrb[0].mxu0 %v52
    %v1652 = vpop.f32.mrb[0].mxu0
    %v1653 = vadd.f32 0.0, %v1652
    %v1654 = vpop.f32.mrb[0].mxu0
    %1655 = vdwg.mxu0
    %s1656 = scalar_lea.vmem %s7, 32
    %v1657 = vld [vmem:[%s1656] sm:$0xff]
    %v1658 = vld [vmem:[%s1656 + $0x8] sm:$0xff]
    %v1659 = vld [vmem:[%s1656 + $0x10] sm:$0xff]
    %v1660 = vld [vmem:[%s1656 + $0x18] sm:$0xff]
    %vm1661 = vcmask 261120
    %v1663 = vsel %vm1661, %v1648, 0
    %v1666 = vsel %vm1661, %v1653, 0
    %1668 = vmatprep.subr.mxu0 0.0
    %1669 = vmatpush1.msra.mxu0 %v1657
    %1670 = vmatprep.subr.mxu0 0.0
    %1671 = vmatpush1.msra.mxu0 %v1658
    %1672 = vmatprep.subr.mxu0 0.0
    %1673 = vmatpush1.msra.mxu0 %v1659
    %1674 = vmatprep.subr.mxu0 0.0
    %1675 = vmatpush1.msra.mxu0 %v1660
    %1676 = vmatprep.subr.mxu0 0.0
    %1677 = vmatpush1.msra.mxu0 0.0
    %1678 = vmatprep.subr.mxu0 0.0
    %1679 = vmatpush1.msra.mxu0 0.0
    %1680 = vmatprep.subr.mxu0 0.0
    %1681 = vmatpush1.msra.mxu0 0.0
    %1682 = vmatprep.subr.mxu0 0.0
    %1683 = vmatpush1.msra.mxu0 0.0
    %1684 = vmatprep.subr.mxu0 0.0
    %1685 = vmatpush1.msra.mxu0 0.0
    %1686 = vmatprep.subr.mxu0 0.0
    %1687 = vmatpush1.msra.mxu0 0.0
    %1688 = vmatprep.subr.mxu0 0.0
    %1689 = vmatpush1.msra.mxu0 0.0
    %1690 = vmatprep.subr.mxu0 0.0
    %1691 = vmatpush1.msra.mxu0 0.0
    %1692 = vmatprep.subr.mxu0 0.0
    %1693 = vmatpush1.msra.mxu0 0.0
    %1694 = vmatprep.subr.mxu0 0.0
    %1695 = vmatpush1.msra.mxu0 0.0
    %1696 = vmatprep.subr.mxu0 0.0
    %1697 = vmatpush1.msra.mxu0 0.0
    %1698 = vmatprep.subr.mxu0 0.0
    %1699 = vmatpush1.msra.mxu0 0.0
    %1700 = vmatprep.subr.mxu0 0.0
    %1701 = vmatpush1.msra.mxu0 0.0
    %1702 = vmatprep.subr.mxu0 0.0
    %1703 = vmatpush1.msra.mxu0 0.0
    %1704 = vmatprep.subr.mxu0 0.0
    %1705 = vmatpush1.msra.mxu0 0.0
    %1706 = vmatprep.subr.mxu0 0.0
    %1707 = vmatpush1.msra.mxu0 0.0
    %1708 = vmatprep.subr.mxu0 0.0
    %1709 = vmatpush1.msra.mxu0 0.0
    %1710 = vmatprep.subr.mxu0 0.0
    %1711 = vmatpush1.msra.mxu0 0.0
    %1712 = vmatprep.subr.mxu0 0.0
    %1713 = vmatpush1.msra.mxu0 0.0
    %1714 = vmatprep.subr.mxu0 0.0
    %1715 = vmatpush1.msra.mxu0 0.0
    %1716 = vmatprep.subr.mxu0 0.0
    %1717 = vmatpush1.msra.mxu0 0.0
    %1718 = vmatprep.subr.mxu0 0.0
    %1719 = vmatpush1.msra.mxu0 0.0
    %1720 = vmatprep.subr.mxu0 0.0
    %1721 = vmatpush1.msra.mxu0 0.0
    %1722 = vmatprep.subr.mxu0 0.0
    %1723 = vmatpush1.msra.mxu0 0.0
    %1724 = vmatprep.subr.mxu0 0.0
    %1725 = vmatpush1.msra.mxu0 0.0
    %1726 = vmatprep.subr.mxu0 0.0
    %1727 = vmatpush1.msra.mxu0 0.0
    %1728 = vmatprep.subr.mxu0 0.0
    %1729 = vmatpush1.msra.mxu0 0.0
    %1730 = vmatprep.subr.mxu0 0.0
    %1731 = vmatpush1.msra.mxu0 0.0
    %1732 = vmatprep.mubr.f32.mxu0 0.0
    %1733 = vmatmul.mubr.f32.gmra.mrb[0].mxu0 %v1663
    %v1734 = vpop.f32.mrb[0].mxu0
    %v1735 = vadd.f32 0.0, %v1734
    %v1736 = vpop.f32.mrb[0].mxu0
    %1737 = vmatprep.mubr.f32.mxu0 0.0
    %1738 = vmatmul.mubr.f32.gmra.mrb[0].mxu0 %v1666
    %v1739 = vpop.f32.mrb[0].mxu0
    %v1740 = vadd.f32 0.0, %v1739
    %v1741 = vpop.f32.mrb[0].mxu0
    %1742 = vdwg.mxu0
    %v1744 = vsel %vm1661, %v1575, 0
    %v1747 = vsel %vm1661, %v1576, 0
    %1749 = vmatprep.subr.mxu0 0.0
    %1750 = vmatpush1.msra.mxu0 %v1577
    %1751 = vmatprep.subr.mxu0 0.0
    %1752 = vmatpush1.msra.mxu0 %v1578
    %1753 = vmatprep.subr.mxu0 0.0
    %1754 = vmatpush1.msra.mxu0 %v1579
    %1755 = vmatprep.subr.mxu0 0.0
    %1756 = vmatpush1.msra.mxu0 %v1580
    %1757 = vmatprep.subr.mxu0 0.0
    %1758 = vmatpush1.msra.mxu0 0.0
    %1759 = vmatprep.subr.mxu0 0.0
    %1760 = vmatpush1.msra.mxu0 0.0
    %1761 = vmatprep.subr.mxu0 0.0
    %1762 = vmatpush1.msra.mxu0 0.0
    %1763 = vmatprep.subr.mxu0 0.0
    %1764 = vmatpush1.msra.mxu0 0.0
    %1765 = vmatprep.subr.mxu0 0.0
    %1766 = vmatpush1.msra.mxu0 0.0
    %1767 = vmatprep.subr.mxu0 0.0
    %1768 = vmatpush1.msra.mxu0 0.0
    %1769 = vmatprep.subr.mxu0 0.0
    %1770 = vmatpush1.msra.mxu0 0.0
    %1771 = vmatprep.subr.mxu0 0.0
    %1772 = vmatpush1.msra.mxu0 0.0
    %1773 = vmatprep.subr.mxu0 0.0
    %1774 = vmatpush1.msra.mxu0 0.0
    %1775 = vmatprep.subr.mxu0 0.0
    %1776 = vmatpush1.msra.mxu0 0.0
    %1777 = vmatprep.subr.mxu0 0.0
    %1778 = vmatpush1.msra.mxu0 0.0
    %1779 = vmatprep.subr.mxu0 0.0
    %1780 = vmatpush1.msra.mxu0 0.0
    %1781 = vmatprep.subr.mxu0 0.0
    %1782 = vmatpush1.msra.mxu0 0.0
    %1783 = vmatprep.subr.mxu0 0.0
    %1784 = vmatpush1.msra.mxu0 0.0
    %1785 = vmatprep.subr.mxu0 0.0
    %1786 = vmatpush1.msra.mxu0 0.0
    %1787 = vmatprep.subr.mxu0 0.0
    %1788 = vmatpush1.msra.mxu0 0.0
    %1789 = vmatprep.subr.mxu0 0.0
    %1790 = vmatpush1.msra.mxu0 0.0
    %1791 = vmatprep.subr.mxu0 0.0
    %1792 = vmatpush1.msra.mxu0 0.0
    %1793 = vmatprep.subr.mxu0 0.0
    %1794 = vmatpush1.msra.mxu0 0.0
    %1795 = vmatprep.subr.mxu0 0.0
    %1796 = vmatpush1.msra.mxu0 0.0
    %1797 = vmatprep.subr.mxu0 0.0
    %1798 = vmatpush1.msra.mxu0 0.0
    %1799 = vmatprep.subr.mxu0 0.0
    %1800 = vmatpush1.msra.mxu0 0.0
    %1801 = vmatprep.subr.mxu0 0.0
    %1802 = vmatpush1.msra.mxu0 0.0
    %1803 = vmatprep.subr.mxu0 0.0
    %1804 = vmatpush1.msra.mxu0 0.0
    %1805 = vmatprep.subr.mxu0 0.0
    %1806 = vmatpush1.msra.mxu0 0.0
    %1807 = vmatprep.subr.mxu0 0.0
    %1808 = vmatpush1.msra.mxu0 0.0
    %1809 = vmatprep.subr.mxu0 0.0
    %1810 = vmatpush1.msra.mxu0 0.0
    %1811 = vmatprep.subr.mxu0 0.0
    %1812 = vmatpush1.msra.mxu0 0.0
    %1813 = vmatprep.mubr.f32.mxu0 0.0
    %1814 = vmatmul.mubr.f32.gmra.mrb[0].mxu0 %v1744
    %v1815 = vpop.f32.mrb[0].mxu0
    %v1816 = vadd.f32 %v1735, %v1815
    %v1817 = vpop.f32.mrb[0].mxu0
    %1818 = vmatprep.mubr.f32.mxu0 0.0
    %1819 = vmatmul.mubr.f32.gmra.mrb[0].mxu0 %v1747
    %v1820 = vpop.f32.mrb[0].mxu0
    %v1821 = vadd.f32 %v1740, %v1820
    %v1822 = vpop.f32.mrb[0].mxu0
    %1823 = vdwg.mxu0
    %1824 = vmatprep.subr.mxu0 0.0
    %1825 = vmatpush1.msra.mxu0 %v1648
    %1826 = vmatprep.subr.mxu0 0.0
    %1827 = vmatpush1.msra.mxu0 %v1653
    %1828 = vmatprep.subr.mxu0 0.0
    %1829 = vmatpush1.msra.mxu0 0.0
    %1830 = vmatprep.subr.mxu0 0.0
    %1831 = vmatpush1.msra.mxu0 0.0
    %1832 = vmatprep.subr.mxu0 0.0
    %1833 = vmatpush1.msra.mxu0 0.0
    %1834 = vmatprep.subr.mxu0 0.0
    %1835 = vmatpush1.msra.mxu0 0.0
    %1836 = vmatprep.subr.mxu0 0.0
    %1837 = vmatpush1.msra.mxu0 0.0
    %1838 = vmatprep.subr.mxu0 0.0
    %1839 = vmatpush1.msra.mxu0 0.0
    %1840 = vmatprep.subr.mxu0 0.0
    %1841 = vmatpush1.msra.mxu0 0.0
    %1842 = vmatprep.subr.mxu0 0.0
    %1843 = vmatpush1.msra.mxu0 0.0
    %1844 = vmatprep.subr.mxu0 0.0
    %1845 = vmatpush1.msra.mxu0 0.0
    %1846 = vmatprep.subr.mxu0 0.0
    %1847 = vmatpush1.msra.mxu0 0.0
    %1848 = vmatprep.subr.mxu0 0.0
    %1849 = vmatpush1.msra.mxu0 0.0
    %1850 = vmatprep.subr.mxu0 0.0
    %1851 = vmatpush1.msra.mxu0 0.0
    %1852 = vmatprep.subr.mxu0 0.0
    %1853 = vmatpush1.msra.mxu0 0.0
    %1854 = vmatprep.subr.mxu0 0.0
    %1855 = vmatpush1.msra.mxu0 0.0
    %1856 = vmatprep.subr.mxu0 0.0
    %1857 = vmatpush1.msra.mxu0 0.0
    %1858 = vmatprep.subr.mxu0 0.0
    %1859 = vmatpush1.msra.mxu0 0.0
    %1860 = vmatprep.subr.mxu0 0.0
    %1861 = vmatpush1.msra.mxu0 0.0
    %1862 = vmatprep.subr.mxu0 0.0
    %1863 = vmatpush1.msra.mxu0 0.0
    %1864 = vmatprep.subr.mxu0 0.0
    %1865 = vmatpush1.msra.mxu0 0.0
    %1866 = vmatprep.subr.mxu0 0.0
    %1867 = vmatpush1.msra.mxu0 0.0
    %1868 = vmatprep.subr.mxu0 0.0
    %1869 = vmatpush1.msra.mxu0 0.0
    %1870 = vmatprep.subr.mxu0 0.0
    %1871 = vmatpush1.msra.mxu0 0.0
    %1872 = vmatprep.subr.mxu0 0.0
    %1873 = vmatpush1.msra.mxu0 0.0
    %1874 = vmatprep.subr.mxu0 0.0
    %1875 = vmatpush1.msra.mxu0 0.0
    %1876 = vmatprep.subr.mxu0 0.0
    %1877 = vmatpush1.msra.mxu0 0.0
    %1878 = vmatprep.subr.mxu0 0.0
    %1879 = vmatpush1.msra.mxu0 0.0
    %1880 = vmatprep.subr.mxu0 0.0
    %1881 = vmatpush1.msra.mxu0 0.0
    %1882 = vmatprep.subr.mxu0 0.0
    %1883 = vmatpush1.msra.mxu0 0.0
    %1884 = vmatprep.subr.mxu0 0.0
    %1885 = vmatpush1.msra.mxu0 0.0
    %1886 = vmatprep.subr.mxu0 0.0
    %1887 = vmatpush1.msra.mxu0 0.0
    %1888 = vmatprep.mubr.f32.mxu0 0.0
    %1889 = vmatmul.mubr.f32.gmra.mrb[0].mxu0 %v49
    %v1890 = vpop.f32.mrb[0].mxu0
    %v1891 = vadd.f32 0.0, %v1890
    %v1892 = vpop.f32.mrb[0].mxu0
    %1893 = vmatprep.mubr.f32.mxu0 0.0
    %1894 = vmatmul.mubr.f32.gmra.mrb[0].mxu0 %v52
    %v1895 = vpop.f32.mrb[0].mxu0
    %v1896 = vadd.f32 0.0, %v1895
    %v1897 = vpop.f32.mrb[0].mxu0
    %1898 = vdwg.mxu0
    %v1899 = vmul.f32 %v1891, 2.0
    %v1900 = vmul.f32 %v1896, 2.0
    %v1901 = vsub.f32 %v1899, %v1575
    %v1902 = vsub.f32 %v1900, %v1576
    %s1903 = scalar_lea.vmem %s7, 64
    %v1904 = vld [vmem:[%s1903] sm:$0xff]
    %v1905 = vld [vmem:[%s1903 + $0x8] sm:$0xff]
    %v1906 = vld [vmem:[%s1903 + $0x10] sm:$0xff]
    %v1907 = vld [vmem:[%s1903 + $0x18] sm:$0xff]
    %v1909 = vsel %vm1661, %v1901, 0
    %v1912 = vsel %vm1661, %v1902, 0
    %1914 = vmatprep.subr.mxu0 0.0
    %1915 = vmatpush1.msra.mxu0 %v1904
    %1916 = vmatprep.subr.mxu0 0.0
    %1917 = vmatpush1.msra.mxu0 %v1905
    %1918 = vmatprep.subr.mxu0 0.0
    %1919 = vmatpush1.msra.mxu0 %v1906
    %1920 = vmatprep.subr.mxu0 0.0
    %1921 = vmatpush1.msra.mxu0 %v1907
    %1922 = vmatprep.subr.mxu0 0.0
    %1923 = vmatpush1.msra.mxu0 0.0
    %1924 = vmatprep.subr.mxu0 0.0
    %1925 = vmatpush1.msra.mxu0 0.0
    %1926 = vmatprep.subr.mxu0 0.0
    %1927 = vmatpush1.msra.mxu0 0.0
    %1928 = vmatprep.subr.mxu0 0.0
    %1929 = vmatpush1.msra.mxu0 0.0
    %1930 = vmatprep.subr.mxu0 0.0
    %1931 = vmatpush1.msra.mxu0 0.0
    %1932 = vmatprep.subr.mxu0 0.0
    %1933 = vmatpush1.msra.mxu0 0.0
    %1934 = vmatprep.subr.mxu0 0.0
    %1935 = vmatpush1.msra.mxu0 0.0
    %1936 = vmatprep.subr.mxu0 0.0
    %1937 = vmatpush1.msra.mxu0 0.0
    %1938 = vmatprep.subr.mxu0 0.0
    %1939 = vmatpush1.msra.mxu0 0.0
    %1940 = vmatprep.subr.mxu0 0.0
    %1941 = vmatpush1.msra.mxu0 0.0
    %1942 = vmatprep.subr.mxu0 0.0
    %1943 = vmatpush1.msra.mxu0 0.0
    %1944 = vmatprep.subr.mxu0 0.0
    %1945 = vmatpush1.msra.mxu0 0.0
    %1946 = vmatprep.subr.mxu0 0.0
    %1947 = vmatpush1.msra.mxu0 0.0
    %1948 = vmatprep.subr.mxu0 0.0
    %1949 = vmatpush1.msra.mxu0 0.0
    %1950 = vmatprep.subr.mxu0 0.0
    %1951 = vmatpush1.msra.mxu0 0.0
    %1952 = vmatprep.subr.mxu0 0.0
    %1953 = vmatpush1.msra.mxu0 0.0
    %1954 = vmatprep.subr.mxu0 0.0
    %1955 = vmatpush1.msra.mxu0 0.0
    %1956 = vmatprep.subr.mxu0 0.0
    %1957 = vmatpush1.msra.mxu0 0.0
    %1958 = vmatprep.subr.mxu0 0.0
    %1959 = vmatpush1.msra.mxu0 0.0
    %1960 = vmatprep.subr.mxu0 0.0
    %1961 = vmatpush1.msra.mxu0 0.0
    %1962 = vmatprep.subr.mxu0 0.0
    %1963 = vmatpush1.msra.mxu0 0.0
    %1964 = vmatprep.subr.mxu0 0.0
    %1965 = vmatpush1.msra.mxu0 0.0
    %1966 = vmatprep.subr.mxu0 0.0
    %1967 = vmatpush1.msra.mxu0 0.0
    %1968 = vmatprep.subr.mxu0 0.0
    %1969 = vmatpush1.msra.mxu0 0.0
    %1970 = vmatprep.subr.mxu0 0.0
    %1971 = vmatpush1.msra.mxu0 0.0
    %1972 = vmatprep.subr.mxu0 0.0
    %1973 = vmatpush1.msra.mxu0 0.0
    %1974 = vmatprep.subr.mxu0 0.0
    %1975 = vmatpush1.msra.mxu0 0.0
    %1976 = vmatprep.subr.mxu0 0.0
    %1977 = vmatpush1.msra.mxu0 0.0
    %1978 = vmatprep.mubr.f32.mxu0 0.0
    %1979 = vmatmul.mubr.f32.gmra.mrb[0].mxu0 %v1909
    %v1980 = vpop.f32.mrb[0].mxu0
    %v1981 = vadd.f32 0.0, %v1980
    %v1982 = vpop.f32.mrb[0].mxu0
    %1983 = vmatprep.mubr.f32.mxu0 0.0
    %1984 = vmatmul.mubr.f32.gmra.mrb[0].mxu0 %v1912
    %v1985 = vpop.f32.mrb[0].mxu0
    %v1986 = vadd.f32 0.0, %v1985
    %v1987 = vpop.f32.mrb[0].mxu0
    %1988 = vdwg.mxu0
    %v1989 = vadd.f32 %v1816, %v1981
    %v1990 = vadd.f32 %v1821, %v1986
    %1991 = vmatprep.subr.mxu0 0.0
    %1992 = vmatpush1.msra.mxu0 %v1648
    %1993 = vmatprep.subr.mxu0 0.0
    %1994 = vmatpush1.msra.mxu0 %v1653
    %1995 = vmatprep.subr.mxu0 0.0
    %1996 = vmatpush1.msra.mxu0 0.0
    %1997 = vmatprep.subr.mxu0 0.0
    %1998 = vmatpush1.msra.mxu0 0.0
    %1999 = vmatprep.subr.mxu0 0.0
    %2000 = vmatpush1.msra.mxu0 0.0
    %2001 = vmatprep.subr.mxu0 0.0
    %2002 = vmatpush1.msra.mxu0 0.0
    %2003 = vmatprep.subr.mxu0 0.0
    %2004 = vmatpush1.msra.mxu0 0.0
    %2005 = vmatprep.subr.mxu0 0.0
    %2006 = vmatpush1.msra.mxu0 0.0
    %2007 = vmatprep.subr.mxu0 0.0
    %2008 = vmatpush1.msra.mxu0 0.0
    %2009 = vmatprep.subr.mxu0 0.0
    %2010 = vmatpush1.msra.mxu0 0.0
    %2011 = vmatprep.subr.mxu0 0.0
    %2012 = vmatpush1.msra.mxu0 0.0
    %2013 = vmatprep.subr.mxu0 0.0
    %2014 = vmatpush1.msra.mxu0 0.0
    %2015 = vmatprep.subr.mxu0 0.0
    %2016 = vmatpush1.msra.mxu0 0.0
    %2017 = vmatprep.subr.mxu0 0.0
    %2018 = vmatpush1.msra.mxu0 0.0
    %2019 = vmatprep.subr.mxu0 0.0
    %2020 = vmatpush1.msra.mxu0 0.0
    %2021 = vmatprep.subr.mxu0 0.0
    %2022 = vmatpush1.msra.mxu0 0.0
    %2023 = vmatprep.subr.mxu0 0.0
    %2024 = vmatpush1.msra.mxu0 0.0
    %2025 = vmatprep.subr.mxu0 0.0
    %2026 = vmatpush1.msra.mxu0 0.0
    %2027 = vmatprep.subr.mxu0 0.0
    %2028 = vmatpush1.msra.mxu0 0.0
    %2029 = vmatprep.subr.mxu0 0.0
    %2030 = vmatpush1.msra.mxu0 0.0
    %2031 = vmatprep.subr.mxu0 0.0
    %2032 = vmatpush1.msra.mxu0 0.0
    %2033 = vmatprep.subr.mxu0 0.0
    %2034 = vmatpush1.msra.mxu0 0.0
    %2035 = vmatprep.subr.mxu0 0.0
    %2036 = vmatpush1.msra.mxu0 0.0
    %2037 = vmatprep.subr.mxu0 0.0
    %2038 = vmatpush1.msra.mxu0 0.0
    %2039 = vmatprep.subr.mxu0 0.0
    %2040 = vmatpush1.msra.mxu0 0.0
    %2041 = vmatprep.subr.mxu0 0.0
    %2042 = vmatpush1.msra.mxu0 0.0
    %2043 = vmatprep.subr.mxu0 0.0
    %2044 = vmatpush1.msra.mxu0 0.0
    %2045 = vmatprep.subr.mxu0 0.0
    %2046 = vmatpush1.msra.mxu0 0.0
    %2047 = vmatprep.subr.mxu0 0.0
    %2048 = vmatpush1.msra.mxu0 0.0
    %2049 = vmatprep.subr.mxu0 0.0
    %2050 = vmatpush1.msra.mxu0 0.0
    %2051 = vmatprep.subr.mxu0 0.0
    %2052 = vmatpush1.msra.mxu0 0.0
    %2053 = vmatprep.subr.mxu0 0.0
    %2054 = vmatpush1.msra.mxu0 0.0
    %2055 = vmatprep.mubr.f32.mxu0 0.0
    %2056 = vmatmul.mubr.f32.gmra.mrb[0].mxu0 %v460
    %v2057 = vpop.f32.mrb[0].mxu0
    %v2058 = vadd.f32 0.0, %v2057
    %v2059 = vpop.f32.mrb[0].mxu0
    %2060 = vmatprep.mubr.f32.mxu0 0.0
    %2061 = vmatmul.mubr.f32.gmra.mrb[0].mxu0 %v463
    %v2062 = vpop.f32.mrb[0].mxu0
    %v2063 = vadd.f32 0.0, %v2062
    %v2064 = vpop.f32.mrb[0].mxu0
    %2065 = vdwg.mxu0
    %s2066 = scalar_lea.vmem %s7, 96
    %v2067 = vld [vmem:[%s2066] sm:$0xff]
    %v2068 = vld [vmem:[%s2066 + $0x8] sm:$0xff]
    %v2069 = vld [vmem:[%s2066 + $0x10] sm:$0xff]
    %v2070 = vld [vmem:[%s2066 + $0x18] sm:$0xff]
    %v2072 = vsel %vm1661, %v2058, 0
    %v2075 = vsel %vm1661, %v2063, 0
    %2077 = vmatprep.subr.mxu0 0.0
    %2078 = vmatpush1.msra.mxu0 %v2067
    %2079 = vmatprep.subr.mxu0 0.0
    %2080 = vmatpush1.msra.mxu0 %v2068
    %2081 = vmatprep.subr.mxu0 0.0
    %2082 = vmatpush1.msra.mxu0 %v2069
    %2083 = vmatprep.subr.mxu0 0.0
    %2084 = vmatpush1.msra.mxu0 %v2070
    %2085 = vmatprep.subr.mxu0 0.0
    %2086 = vmatpush1.msra.mxu0 0.0
    %2087 = vmatprep.subr.mxu0 0.0
    %2088 = vmatpush1.msra.mxu0 0.0
    %2089 = vmatprep.subr.mxu0 0.0
    %2090 = vmatpush1.msra.mxu0 0.0
    %2091 = vmatprep.subr.mxu0 0.0
    %2092 = vmatpush1.msra.mxu0 0.0
    %2093 = vmatprep.subr.mxu0 0.0
    %2094 = vmatpush1.msra.mxu0 0.0
    %2095 = vmatprep.subr.mxu0 0.0
    %2096 = vmatpush1.msra.mxu0 0.0
    %2097 = vmatprep.subr.mxu0 0.0
    %2098 = vmatpush1.msra.mxu0 0.0
    %2099 = vmatprep.subr.mxu0 0.0
    %2100 = vmatpush1.msra.mxu0 0.0
    %2101 = vmatprep.subr.mxu0 0.0
    %2102 = vmatpush1.msra.mxu0 0.0
    %2103 = vmatprep.subr.mxu0 0.0
    %2104 = vmatpush1.msra.mxu0 0.0
    %2105 = vmatprep.subr.mxu0 0.0
    %2106 = vmatpush1.msra.mxu0 0.0
    %2107 = vmatprep.subr.mxu0 0.0
    %2108 = vmatpush1.msra.mxu0 0.0
    %2109 = vmatprep.subr.mxu0 0.0
    %2110 = vmatpush1.msra.mxu0 0.0
    %2111 = vmatprep.subr.mxu0 0.0
    %2112 = vmatpush1.msra.mxu0 0.0
    %2113 = vmatprep.subr.mxu0 0.0
    %2114 = vmatpush1.msra.mxu0 0.0
    %2115 = vmatprep.subr.mxu0 0.0
    %2116 = vmatpush1.msra.mxu0 0.0
    %2117 = vmatprep.subr.mxu0 0.0
    %2118 = vmatpush1.msra.mxu0 0.0
    %2119 = vmatprep.subr.mxu0 0.0
    %2120 = vmatpush1.msra.mxu0 0.0
    %2121 = vmatprep.subr.mxu0 0.0
    %2122 = vmatpush1.msra.mxu0 0.0
    %2123 = vmatprep.subr.mxu0 0.0
    %2124 = vmatpush1.msra.mxu0 0.0
    %2125 = vmatprep.subr.mxu0 0.0
    %2126 = vmatpush1.msra.mxu0 0.0
    %2127 = vmatprep.subr.mxu0 0.0
    %2128 = vmatpush1.msra.mxu0 0.0
    %2129 = vmatprep.subr.mxu0 0.0
    %2130 = vmatpush1.msra.mxu0 0.0
    %2131 = vmatprep.subr.mxu0 0.0
    %2132 = vmatpush1.msra.mxu0 0.0
    %2133 = vmatprep.subr.mxu0 0.0
    %2134 = vmatpush1.msra.mxu0 0.0
    %2135 = vmatprep.subr.mxu0 0.0
    %2136 = vmatpush1.msra.mxu0 0.0
    %2137 = vmatprep.subr.mxu0 0.0
    %2138 = vmatpush1.msra.mxu0 0.0
    %2139 = vmatprep.subr.mxu0 0.0
    %2140 = vmatpush1.msra.mxu0 0.0
    %2141 = vmatprep.mubr.f32.mxu0 0.0
    %2142 = vmatmul.mubr.f32.gmra.mrb[0].mxu0 %v2072
    %v2143 = vpop.f32.mrb[0].mxu0
    %v2144 = vadd.f32 0.0, %v2143
    %v2145 = vpop.f32.mrb[0].mxu0
    %2146 = vmatprep.mubr.f32.mxu0 0.0
    %2147 = vmatmul.mubr.f32.gmra.mrb[0].mxu0 %v2075
    %v2148 = vpop.f32.mrb[0].mxu0
    %v2149 = vadd.f32 0.0, %v2148
    %v2150 = vpop.f32.mrb[0].mxu0
    %2151 = vdwg.mxu0
    %v2152 = vadd.f32 %v1989, %v2144
    %v2153 = vadd.f32 %v1990, %v2149
    %2154 = vmatprep.subr.mxu0 0.0
    %2155 = vmatpush1.msra.mxu0 %v2058
    %2156 = vmatprep.subr.mxu0 0.0
    %2157 = vmatpush1.msra.mxu0 %v2063
    %2158 = vmatprep.subr.mxu0 0.0
    %2159 = vmatpush1.msra.mxu0 0.0
    %2160 = vmatprep.subr.mxu0 0.0
    %2161 = vmatpush1.msra.mxu0 0.0
    %2162 = vmatprep.subr.mxu0 0.0
    %2163 = vmatpush1.msra.mxu0 0.0
    %2164 = vmatprep.subr.mxu0 0.0
    %2165 = vmatpush1.msra.mxu0 0.0
    %2166 = vmatprep.subr.mxu0 0.0
    %2167 = vmatpush1.msra.mxu0 0.0
    %2168 = vmatprep.subr.mxu0 0.0
    %2169 = vmatpush1.msra.mxu0 0.0
    %2170 = vmatprep.subr.mxu0 0.0
    %2171 = vmatpush1.msra.mxu0 0.0
    %2172 = vmatprep.subr.mxu0 0.0
    %2173 = vmatpush1.msra.mxu0 0.0
    %2174 = vmatprep.subr.mxu0 0.0
    %2175 = vmatpush1.msra.mxu0 0.0
    %2176 = vmatprep.subr.mxu0 0.0
    %2177 = vmatpush1.msra.mxu0 0.0
    %2178 = vmatprep.subr.mxu0 0.0
    %2179 = vmatpush1.msra.mxu0 0.0
    %2180 = vmatprep.subr.mxu0 0.0
    %2181 = vmatpush1.msra.mxu0 0.0
    %2182 = vmatprep.subr.mxu0 0.0
    %2183 = vmatpush1.msra.mxu0 0.0
    %2184 = vmatprep.subr.mxu0 0.0
    %2185 = vmatpush1.msra.mxu0 0.0
    %2186 = vmatprep.subr.mxu0 0.0
    %2187 = vmatpush1.msra.mxu0 0.0
    %2188 = vmatprep.subr.mxu0 0.0
    %2189 = vmatpush1.msra.mxu0 0.0
    %2190 = vmatprep.subr.mxu0 0.0
    %2191 = vmatpush1.msra.mxu0 0.0
    %2192 = vmatprep.subr.mxu0 0.0
    %2193 = vmatpush1.msra.mxu0 0.0
    %2194 = vmatprep.subr.mxu0 0.0
    %2195 = vmatpush1.msra.mxu0 0.0
    %2196 = vmatprep.subr.mxu0 0.0
    %2197 = vmatpush1.msra.mxu0 0.0
    %2198 = vmatprep.subr.mxu0 0.0
    %2199 = vmatpush1.msra.mxu0 0.0
    %2200 = vmatprep.subr.mxu0 0.0
    %2201 = vmatpush1.msra.mxu0 0.0
    %2202 = vmatprep.subr.mxu0 0.0
    %2203 = vmatpush1.msra.mxu0 0.0
    %2204 = vmatprep.subr.mxu0 0.0
    %2205 = vmatpush1.msra.mxu0 0.0
    %2206 = vmatprep.subr.mxu0 0.0
    %2207 = vmatpush1.msra.mxu0 0.0
    %2208 = vmatprep.subr.mxu0 0.0
    %2209 = vmatpush1.msra.mxu0 0.0
    %2210 = vmatprep.subr.mxu0 0.0
    %2211 = vmatpush1.msra.mxu0 0.0
    %2212 = vmatprep.subr.mxu0 0.0
    %2213 = vmatpush1.msra.mxu0 0.0
    %2214 = vmatprep.subr.mxu0 0.0
    %2215 = vmatpush1.msra.mxu0 0.0
    %2216 = vmatprep.subr.mxu0 0.0
    %2217 = vmatpush1.msra.mxu0 0.0
    %2218 = vmatprep.mubr.f32.mxu0 0.0
    %2219 = vmatmul.mubr.f32.gmra.mrb[0].mxu0 %v460
    %v2220 = vpop.f32.mrb[0].mxu0
    %v2221 = vadd.f32 0.0, %v2220
    %v2222 = vpop.f32.mrb[0].mxu0
    %2223 = vmatprep.mubr.f32.mxu0 0.0
    %2224 = vmatmul.mubr.f32.gmra.mrb[0].mxu0 %v463
    %v2225 = vpop.f32.mrb[0].mxu0
    %v2226 = vadd.f32 0.0, %v2225
    %v2227 = vpop.f32.mrb[0].mxu0
    %2228 = vdwg.mxu0
    %v2229 = vmul.f32 %v2221, 2.0
    %v2230 = vmul.f32 %v2226, 2.0
    %v2231 = vsub.f32 %v2229, %v1648
    %v2232 = vsub.f32 %v2230, %v1653
    %s2233 = scalar_lea.vmem %s7, 128
    %v2234 = vld [vmem:[%s2233] sm:$0xff]
    %v2235 = vld [vmem:[%s2233 + $0x8] sm:$0xff]
    %v2236 = vld [vmem:[%s2233 + $0x10] sm:$0xff]
    %v2237 = vld [vmem:[%s2233 + $0x18] sm:$0xff]
    %v2239 = vsel %vm1661, %v2231, 0
    %v2242 = vsel %vm1661, %v2232, 0
    %2244 = vmatprep.subr.mxu0 0.0
    %2245 = vmatpush1.msra.mxu0 %v2234
    %2246 = vmatprep.subr.mxu0 0.0
    %2247 = vmatpush1.msra.mxu0 %v2235
    %2248 = vmatprep.subr.mxu0 0.0
    %2249 = vmatpush1.msra.mxu0 %v2236
    %2250 = vmatprep.subr.mxu0 0.0
    %2251 = vmatpush1.msra.mxu0 %v2237
    %2252 = vmatprep.subr.mxu0 0.0
    %2253 = vmatpush1.msra.mxu0 0.0
    %2254 = vmatprep.subr.mxu0 0.0
    %2255 = vmatpush1.msra.mxu0 0.0
    %2256 = vmatprep.subr.mxu0 0.0
    %2257 = vmatpush1.msra.mxu0 0.0
    %2258 = vmatprep.subr.mxu0 0.0
    %2259 = vmatpush1.msra.mxu0 0.0
    %2260 = vmatprep.subr.mxu0 0.0
    %2261 = vmatpush1.msra.mxu0 0.0
    %2262 = vmatprep.subr.mxu0 0.0
    %2263 = vmatpush1.msra.mxu0 0.0
    %2264 = vmatprep.subr.mxu0 0.0
    %2265 = vmatpush1.msra.mxu0 0.0
    %2266 = vmatprep.subr.mxu0 0.0
    %2267 = vmatpush1.msra.mxu0 0.0
    %2268 = vmatprep.subr.mxu0 0.0
    %2269 = vmatpush1.msra.mxu0 0.0
    %2270 = vmatprep.subr.mxu0 0.0
    %2271 = vmatpush1.msra.mxu0 0.0
    %2272 = vmatprep.subr.mxu0 0.0
    %2273 = vmatpush1.msra.mxu0 0.0
    %2274 = vmatprep.subr.mxu0 0.0
    %2275 = vmatpush1.msra.mxu0 0.0
    %2276 = vmatprep.subr.mxu0 0.0
    %2277 = vmatpush1.msra.mxu0 0.0
    %2278 = vmatprep.subr.mxu0 0.0
    %2279 = vmatpush1.msra.mxu0 0.0
    %2280 = vmatprep.subr.mxu0 0.0
    %2281 = vmatpush1.msra.mxu0 0.0
    %2282 = vmatprep.subr.mxu0 0.0
    %2283 = vmatpush1.msra.mxu0 0.0
    %2284 = vmatprep.subr.mxu0 0.0
    %2285 = vmatpush1.msra.mxu0 0.0
    %2286 = vmatprep.subr.mxu0 0.0
    %2287 = vmatpush1.msra.mxu0 0.0
    %2288 = vmatprep.subr.mxu0 0.0
    %2289 = vmatpush1.msra.mxu0 0.0
    %2290 = vmatprep.subr.mxu0 0.0
    %2291 = vmatpush1.msra.mxu0 0.0
    %2292 = vmatprep.subr.mxu0 0.0
    %2293 = vmatpush1.msra.mxu0 0.0
    %2294 = vmatprep.subr.mxu0 0.0
    %2295 = vmatpush1.msra.mxu0 0.0
    %2296 = vmatprep.subr.mxu0 0.0
    %2297 = vmatpush1.msra.mxu0 0.0
    %2298 = vmatprep.subr.mxu0 0.0
    %2299 = vmatpush1.msra.mxu0 0.0
    %2300 = vmatprep.subr.mxu0 0.0
    %2301 = vmatpush1.msra.mxu0 0.0
    %2302 = vmatprep.subr.mxu0 0.0
    %2303 = vmatpush1.msra.mxu0 0.0
    %2304 = vmatprep.subr.mxu0 0.0
    %2305 = vmatpush1.msra.mxu0 0.0
    %2306 = vmatprep.subr.mxu0 0.0
    %2307 = vmatpush1.msra.mxu0 0.0
    %2308 = vmatprep.mubr.f32.mxu0 0.0
    %2309 = vmatmul.mubr.f32.gmra.mrb[0].mxu0 %v2239
    %v2310 = vpop.f32.mrb[0].mxu0
    %v2311 = vadd.f32 0.0, %v2310
    %v2312 = vpop.f32.mrb[0].mxu0
    %2313 = vmatprep.mubr.f32.mxu0 0.0
    %2314 = vmatmul.mubr.f32.gmra.mrb[0].mxu0 %v2242
    %v2315 = vpop.f32.mrb[0].mxu0
    %v2316 = vadd.f32 0.0, %v2315
    %v2317 = vpop.f32.mrb[0].mxu0
    %2318 = vdwg.mxu0
    %v2319 = vadd.f32 %v2152, %v2311
    %v2320 = vadd.f32 %v2153, %v2316
    %v2321 = vld [vmem:[%s8] sm:$0x1]
    %v2323 = vlaneseq
    %v2324 = vshrl.u32 %v2323, 7
    %v2325 = vsub.s32 0, %v2324
    %v2326 = vrot.slane %v2321, %v2325
    %v2328 = vadd.f32 %v2319, %v2326
    %v2329 = vadd.f32 %v2320, %v2326
    %v2330 = vmax.f32 %v2328, 0.0
    %v2331 = vmax.f32 %v2329, 0.0
    %v2332 = vld [vmem:[%s9] sm:$0xff]
    %v2333 = vld [vmem:[%s9 + $0x8] sm:$0xff]
    %v2334 = vld [vmem:[%s9 + $0x10] sm:$0xff]
    %v2335 = vld [vmem:[%s9 + $0x18] sm:$0xff]
    %v2336 = vld [vmem:[%s9 + $0x20] sm:$0xff]
    %v2337 = vld [vmem:[%s9 + $0x28] sm:$0xff]
    %v2338 = vld [vmem:[%s9 + $0x30] sm:$0xff]
    %v2339 = vld [vmem:[%s9 + $0x38] sm:$0xff]
    %v2340 = vld [vmem:[%s10] sm:$0x1]
    %v2342 = vlaneseq
    %v2343 = vshrl.u32 %v2342, 7
    %v2344 = vsub.s32 0, %v2343
    %v2345 = vrot.slane %v2340, %v2344
    %v2348 = vsel %vm894, %v2330, 0
    %v2351 = vsel %vm894, %v2331, 0
    %2353 = vmatprep.subr.mxu0 0.0
    %2354 = vmatpush1.msra.mxu0 %v2332
    %2355 = vmatprep.subr.mxu0 0.0
    %2356 = vmatpush1.msra.mxu0 %v2333
    %2357 = vmatprep.subr.mxu0 0.0
    %2358 = vmatpush1.msra.mxu0 %v2334
    %2359 = vmatprep.subr.mxu0 0.0
    %2360 = vmatpush1.msra.mxu0 %v2335
    %2361 = vmatprep.subr.mxu0 0.0
    %2362 = vmatpush1.msra.mxu0 %v2336
    %2363 = vmatprep.subr.mxu0 0.0
    %2364 = vmatpush1.msra.mxu0 %v2337
    %2365 = vmatprep.subr.mxu0 0.0
    %2366 = vmatpush1.msra.mxu0 %v2338
    %2367 = vmatprep.subr.mxu0 0.0
    %2368 = vmatpush1.msra.mxu0 %v2339
    %2369 = vmatprep.subr.mxu0 0.0
    %2370 = vmatpush1.msra.mxu0 0.0
    %2371 = vmatprep.subr.mxu0 0.0
    %2372 = vmatpush1.msra.mxu0 0.0
    %2373 = vmatprep.subr.mxu0 0.0
    %2374 = vmatpush1.msra.mxu0 0.0
    %2375 = vmatprep.subr.mxu0 0.0
    %2376 = vmatpush1.msra.mxu0 0.0
    %2377 = vmatprep.subr.mxu0 0.0
    %2378 = vmatpush1.msra.mxu0 0.0
    %2379 = vmatprep.subr.mxu0 0.0
    %2380 = vmatpush1.msra.mxu0 0.0
    %2381 = vmatprep.subr.mxu0 0.0
    %2382 = vmatpush1.msra.mxu0 0.0
    %2383 = vmatprep.subr.mxu0 0.0
    %2384 = vmatpush1.msra.mxu0 0.0
    %2385 = vmatprep.subr.mxu0 0.0
    %2386 = vmatpush1.msra.mxu0 0.0
    %2387 = vmatprep.subr.mxu0 0.0
    %2388 = vmatpush1.msra.mxu0 0.0
    %2389 = vmatprep.subr.mxu0 0.0
    %2390 = vmatpush1.msra.mxu0 0.0
    %2391 = vmatprep.subr.mxu0 0.0
    %2392 = vmatpush1.msra.mxu0 0.0
    %2393 = vmatprep.subr.mxu0 0.0
    %2394 = vmatpush1.msra.mxu0 0.0
    %2395 = vmatprep.subr.mxu0 0.0
    %2396 = vmatpush1.msra.mxu0 0.0
    %2397 = vmatprep.subr.mxu0 0.0
    %2398 = vmatpush1.msra.mxu0 0.0
    %2399 = vmatprep.subr.mxu0 0.0
    %2400 = vmatpush1.msra.mxu0 0.0
    %2401 = vmatprep.subr.mxu0 0.0
    %2402 = vmatpush1.msra.mxu0 0.0
    %2403 = vmatprep.subr.mxu0 0.0
    %2404 = vmatpush1.msra.mxu0 0.0
    %2405 = vmatprep.subr.mxu0 0.0
    %2406 = vmatpush1.msra.mxu0 0.0
    %2407 = vmatprep.subr.mxu0 0.0
    %2408 = vmatpush1.msra.mxu0 0.0
    %2409 = vmatprep.subr.mxu0 0.0
    %2410 = vmatpush1.msra.mxu0 0.0
    %2411 = vmatprep.subr.mxu0 0.0
    %2412 = vmatpush1.msra.mxu0 0.0
    %2413 = vmatprep.subr.mxu0 0.0
    %2414 = vmatpush1.msra.mxu0 0.0
    %2415 = vmatprep.subr.mxu0 0.0
    %2416 = vmatpush1.msra.mxu0 0.0
    %2417 = vmatprep.mubr.f32.mxu0 0.0
    %2418 = vmatmul.mubr.f32.gmra.mrb[0].mxu0 %v2348
    %v2419 = vpop.f32.mrb[0].mxu0
    %v2420 = vadd.f32 %v2345, %v2419
    %v2421 = vpop.f32.mrb[0].mxu0
    %2422 = vmatprep.mubr.f32.mxu0 0.0
    %2423 = vmatmul.mubr.f32.gmra.mrb[0].mxu0 %v2351
    %v2424 = vpop.f32.mrb[0].mxu0
    %v2425 = vadd.f32 %v2345, %v2424
    %v2426 = vpop.f32.mrb[0].mxu0
    %2427 = vdwg.mxu0
    %v2428 = vlaneseq
    %v2429 = vand.u32 %v2428, 127
    %vm2430 = vcmp.lt.s32.totalorder %v2429, 0
    %v2431 = vsub.s32 0, %v2429
    %v2432 = vsel %vm2430, %v2431, %v2429
    %v2433 = vshrl.u32 %v2432, 4
    %v2434 = vand.u32 %v2432, 15
    %v2435 = vsub.s32 0, %v2434
    %v2436 = vsel %vm2430, %v2435, %v2434
    %vm2437 = vcmp.ne.s32.totalorder %v2436, 0
    %vm2438 = vcmp.lt.s32.totalorder %v2436, 0
    %vm2439 = vmand %vm2438, %vm2437
    %v2440 = vadd.s32 %v2436, 16
    %v2441 = vsel %vm2439, %v2440, %v2436
    %vm2442 = vcmp.ge.s32.totalorder %v2441, 8
    %v2443 = vmax.f32 %v2420, 0.0
    %v2444 = vmax.f32 %v2425, 0.0
    %v2445 = vand.u32 2147483647, %v2420
    %v2446 = vand.u32 2147483647, %v2425
    %v2447 = vsub.f32 0.0, %v2445
    %v2448 = vsub.f32 0.0, %v2446
    %v2449 = vmul.f32 %v2447, 1.442695
    %v2450 = vpow.pop %v2449
    %v2451 = vmul.f32 %v2448, 1.442695
    %v2452 = vpow.pop %v2451
    %v2453 = vadd.f32 %v2450, 1.0
    %v2454 = vlog2.pop %v2453
    %v2455 = vmul.f32 %v2454, 0.6931472
    %v2456 = vmul.f32 -0.5, %v2450
    %v2457 = vadd.f32 %v2456, 1.0
    %v2458 = vmul.f32 %v2457, %v2450
    %v2459 = vand.u32 2147483647, %v2450
    %vm2460 = vcmp.lt.f32.partialorder %v2459, 0.0004427343
    %v2461 = vsel %vm2460, %v2458, %v2455
    %v2462 = vadd.f32 %v2452, 1.0
    %v2463 = vlog2.pop %v2462
    %v2464 = vmul.f32 %v2463, 0.6931472
    %v2465 = vmul.f32 -0.5, %v2452
    %v2466 = vadd.f32 %v2465, 1.0
    %v2467 = vmul.f32 %v2466, %v2452
    %v2468 = vand.u32 2147483647, %v2452
    %vm2469 = vcmp.lt.f32.partialorder %v2468, 0.0004427343
    %v2470 = vsel %vm2469, %v2467, %v2464
    %v2471 = vadd.f32 %v2443, %v2461
    %v2472 = vadd.f32 %v2444, %v2470
    %v2473 = vsel %vm2442, %v2471, %v2420
    %v2474 = vsel %vm2442, %v2472, %v2425
    %2475 = vst.msk [vmem:[#allocation2] sm:$0xff] %vm1661, %v2473
    %2476 = vst.msk [vmem:[#allocation2 + $0x8] sm:$0xff] %vm1661, %v2474
    // Predicated region
    $region46: #{tpu_custom_call.1} parent=1 // pred_check
      _
    $region47: #{tpu_custom_call.1} parent=1 // pred_check_branch
      %2478 = sbr.rel (0) target = $region49
    $region48: #{tpu_custom_call.1} parent=1 // pred_region
      %s2480 = ssub.s32 256, 256
      %2481 = vsyncadd [#allocation3], %s2480
      %s2482 = sshll.u32 [#allocation2], 4
      %s2483 = int_to_ptr.vmem [resolvable:$true] %s2482
      %2488 = dma.vmem_to_hbm [thread:$0]  %s2483, 256, %s11, [#allocation3], 128, 128, 8
    $region49: #{tpu_custom_call.1} parent=1 // pred_fallthru
      _
    // Predicated region
    $region50: #{tpu_custom_call.1} parent=1 // pred_check
      _
    $region51: #{tpu_custom_call.1} parent=1 // pred_check_branch
      %2490 = sbr.rel (0) target = $region53
    $region52: #{tpu_custom_call.1} parent=1 // pred_region
      %2491 = dma.done [#allocation3], 256
    $region53: #{tpu_custom_call.1} parent=1 // pred_fallthru
      _
    %2492 = vsyncpa [#allocation3], 1

</llo_original>
